<compile_context>
chip_gen: v5e
topology: v5e:2x2
jax: 0.10.0
libtpu: 0.0.40
codegen_flags: <defaults>
</compile_context>

<pallas_src>
import functools

import numpy as np

import jax
import jax.numpy as jnp
from jax.experimental import pallas as pl
from jax.experimental.pallas import tpu as pltpu


# ----------------------------------------------------------------------------
# Pallas kernel: one grid step == G (batch, head, image-block) problems
# ----------------------------------------------------------------------------
def _halo_attn_kernel(q_ref, kt_ref, vt_ref, tile_ref, qsel_ref, c_ref,
                      msk_ref, o_ref, *, scale):
    # q_ref    : (G, n_q, dh)  bf16
    # kt_ref   : (G, dh, n_k)  bf16   k pre-transposed (lane-dense n_k)
    # vt_ref   : (G, dh, n_k)  bf16   v pre-transposed (lane-dense n_k)
    # tile_ref : (dh, L)       bf16   TILE[d, l] = (l % dh == d)   (constant)
    # qsel_ref : (n_q, L)      f32    0/1 block-diagonal selector  (constant)
    # c_ref    : (L, n_k)      bf16   shared rel-pos table         (constant)
    # msk_ref  : (G, 1, n_k)   f32    1.0 where key pixel lies inside image
    G, n_q, dh = q_ref.shape
    n_k = kt_ref.shape[2]
    L = tile_ref.shape[1]

    q = q_ref[...]                                                   # bf16

    # content logits: batched q @ k^T on the MXU (bf16 in, f32 accumulate)
    content = jax.lax.dot_general(
        q, kt_ref[...], (((2,), (1,)), ((0,), (0,))),
        preferred_element_type=jnp.float32)                          # (G, n_q, n_k)

    # relative-position logits.  Rebuild the block-diagonal expansion of q in
    # VMEM: lane-tile q from dh to L = 2*block*dh lanes with a tiny MXU matmul
    # (exact: TILE has a single 1.0 per column), zero the lanes that do not
    # match this query's (x, y) via the 0/1 selector, then hit the shared
    # rel-pos table with one lane-dense matmul.
    q2 = q.reshape(G * n_q, dh)
    qt = jnp.dot(q2, tile_ref[...], preferred_element_type=jnp.float32)
    qt = qt.reshape(G, n_q, L)
    q_rel = (qt * qsel_ref[...][None, :, :]).reshape(G * n_q, L)
    rel = jnp.dot(q_rel.astype(jnp.bfloat16), c_ref[...],
                  preferred_element_type=jnp.float32).reshape(G, n_q, n_k)

    sim = (content + rel) * scale

    # Faithful to upstream masked_fill_(mask, -max): in-image keys get -max.
    neg = -jnp.finfo(jnp.float32).max
    valid = msk_ref[...] > 0.5                                       # (G, 1, n_k)
    sim = jnp.where(valid, neg, sim)

    # softmax over keys; normalization deferred until after the PV matmul.
    sim = sim - jnp.max(sim, axis=-1, keepdims=True)
    p = jnp.exp(sim)
    denom = jnp.sum(p, axis=-1, keepdims=True)                       # (G, n_q, 1)

    out = jax.lax.dot_general(
        p.astype(vt_ref.dtype), vt_ref[...], (((2,), (2,)), ((0,), (0,))),
        preferred_element_type=jnp.float32)                          # (G, n_q, dh)
    out = out * pl.reciprocal(denom, approx=True)
    o_ref[...] = out.astype(o_ref.dtype)


# ----------------------------------------------------------------------------
# Group-size / VMEM helpers
# ----------------------------------------------------------------------------
def _vmem_capacity_bytes():
    try:
        return int(pltpu.get_tpu_info().vmem_capacity_bytes)
    except Exception:
        return 64 * 1024 * 1024        # conservative default (v7x per-core VMEM)


def _choose_group(nb, outer, per_problem_bytes, vmem_budget_bytes):
    """Pick G = problems per grid step.

    G is either a multiple of nb (whole image-block groups) or a divisor of
    nb, so with (batch, head, image-block) problem ordering the in-image mask
    pattern is periodic per grid step.  Prefer the largest G whose
    double-buffered tiles fit the VMEM budget while keeping >= 4 grid steps
    (pipelining + megacore); relax to >= 2, then 1 for tiny problems.
    """
    BH = nb * outer
    cands = set()
    for t in range(1, outer + 1):
        if outer % t == 0:
            cands.add(nb * t)
    for s in range(1, nb + 1):
        if nb % s == 0:
            cands.add(nb // s)
    fits = sorted(g for g in cands if 2 * g * per_problem_bytes <= vmem_budget_bytes)
    if not fits:
        fits = [min(cands)]
    for min_steps in (4, 2, 1):
        ok = [g for g in fits if BH // g >= min_steps]
        if ok:
            return max(ok)
    return fits[0]


# ----------------------------------------------------------------------------
# Parameter init (deterministic, shapes from HaloAttention.__init__)
# ----------------------------------------------------------------------------
def init_params(key, *, dim, block, halo, dim_head, heads):
    inner = dim_head * heads
    rel_size = block + 2 * halo
    ks = jax.random.split(key, 6)
    scale = dim_head ** -0.5
    return dict(
        rel_height=jax.random.normal(ks[0], (rel_size * 2 - 1, dim_head), jnp.float32) * scale,
        rel_width=jax.random.normal(ks[1], (rel_size * 2 - 1, dim_head), jnp.float32) * scale,
        w_q=jax.random.normal(ks[2], (inner, dim), jnp.float32) * (dim ** -0.5),
        w_kv=jax.random.normal(ks[3], (2 * inner, dim), jnp.float32) * (dim ** -0.5),
        w_out=jax.random.normal(ks[4], (dim, inner), jnp.float32) * (inner ** -0.5),
        b_out=jax.random.normal(ks[5], (dim,), jnp.float32) * 0.01,
    )


# ----------------------------------------------------------------------------
# Kernel-based forward
# ----------------------------------------------------------------------------
def halo_attention_forward(x, params, *, block, halo, heads, dim_head,
                           group_size=None):
    b, c, h, w = x.shape
    K = block + 2 * halo
    r = K
    nh, nw = h // block, w // block
    nb = nh * nw
    n_q, n_k = block * block, K * K
    inner = heads * dim_head
    scale = dim_head ** -0.5
    BH = b * heads * nb
    L = 2 * block * dim_head

    # cheap in-kernel leading-dim reshapes want n_q sublane-aligned
    assert n_q % 8 == 0, "kernel assumes block*block is a multiple of 8"

    # --- project first (to_q / to_kv are bias-free => linear, so projecting
    # before the 4x-duplicating unfold is exact and ~4x cheaper) --------------
    q_map = jnp.einsum('oc,bchw->bohw', params['w_q'], x)             # (b, inner, h, w)
    kv_map = jnp.einsum('oc,bchw->bohw', params['w_kv'], x)           # (b, 2*inner, h, w)

    q_proj = (q_map.reshape(b, inner, nh, block, nw, block)
                    .transpose(0, 2, 4, 3, 5, 1)
                    .reshape(b * nb, n_q, inner))

    kv_pad = jnp.pad(kv_map, ((0, 0), (0, 0), (halo, halo), (halo, halo)))
    row = jnp.arange(nh)[:, None] * block + jnp.arange(K)[None, :]
    col = jnp.arange(nw)[:, None] * block + jnp.arange(K)[None, :]
    tmp = kv_pad[:, :, row, :]                                        # (b, 2i, nh, K, Wp)
    patches = tmp[:, :, :, :, col]                                    # (b, 2i, nh, K, nw, K)
    kv_patch = (patches.transpose(0, 2, 4, 3, 5, 1)
                        .reshape(b * nb, n_k, 2 * inner))
    k_proj, v_proj = kv_patch[..., :inner], kv_patch[..., inner:]

    # --- head split, (batch, head, image-block) ordering, bf16, k/v transposed
    qh = (q_proj.reshape(b, nb, n_q, heads, dim_head)
                 .transpose(0, 3, 1, 2, 4)
                 .reshape(BH, n_q, dim_head)
                 .astype(jnp.bfloat16))
    kt = (k_proj.reshape(b, nb, n_k, heads, dim_head)
                 .transpose(0, 3, 1, 4, 2)
                 .reshape(BH, dim_head, n_k)
                 .astype(jnp.bfloat16))
    vt = (v_proj.reshape(b, nb, n_k, heads, dim_head)
                 .transpose(0, 3, 1, 4, 2)
                 .reshape(BH, dim_head, n_k)
                 .astype(jnp.bfloat16))

    # --- constant tables (constant index_maps => DMA'd once) -----------------
    # TILE[d, l] = (l % dh == d): lane-tiles q from dh to L lanes on the MXU.
    tile_c = (jnp.arange(L)[None, :] % dim_head
              == jnp.arange(dim_head)[:, None]).astype(jnp.bfloat16)  # (dh, L)

    # QSEL[n, l]: block-diagonal selector.  For query n = x*block + y keep the
    # width lanes y*dh..(y+1)*dh and the height lanes block*dh + x*dh..(x+1)*dh.
    q_ids = jnp.arange(n_q)
    qx, qy = q_ids // block, q_ids % block
    lidx = jnp.arange(L)
    grp = lidx // dim_head
    sel_w = (grp[None, :] == qy[:, None]) & (lidx[None, :] < block * dim_head)
    sel_h = ((grp[None, :] - block) == qx[:, None]) & (lidx[None, :] >= block * dim_head)
    qsel = (sel_w | sel_h).astype(jnp.float32)                        # (n_q, L)

    # Shared rel-pos table C:
    #   C[y'*dh+d,            i*r+j] = rel_width [j - y' + r - 1, d]
    #   C[block*dh + x'*dh+d, i*r+j] = rel_height[i - x' + r - 1, d]
    off = jnp.arange(r)[None, :] - jnp.arange(block)[:, None] + (r - 1)   # (block, r)
    Rw = params['rel_width'][off]                                     # [y', j, d]
    Rh = params['rel_height'][off]                                    # [x', i, d]
    Cw = jnp.tile(Rw.transpose(0, 2, 1).reshape(block * dim_head, r), (1, r))
    Ch = jnp.repeat(Rh.transpose(0, 2, 1).reshape(block * dim_head, r), r, axis=1)
    C = jnp.concatenate([Cw, Ch], axis=0).astype(jnp.bfloat16)        # (L, n_k)

    # In-image mask per image block (1.0 == key pixel inside the image).
    prow = jnp.arange(nh)[:, None] * block - halo + jnp.arange(K)[None, :]
    pcol = jnp.arange(nw)[:, None] * block - halo + jnp.arange(K)[None, :]
    rvalid = (prow >= 0) & (prow < h)
    cvalid = (pcol >= 0) & (pcol < w)
    valid_blk = (rvalid[:, None, :, None] & cvalid[None, :, None, :]
                 ).reshape(nb, n_k).astype(jnp.float32)

    # --- group size / grid, sized from per-generation VMEM -------------------
    per_prob = 2 * (n_q * dim_head + 2 * dim_head * n_k) + 4 * n_q * dim_head
    vmem_cap = _vmem_capacity_bytes()
    G = group_size if group_size is not None else _choose_group(
        nb, b * heads, per_prob, vmem_cap // 3)
    assert BH % G == 0 and (G % nb == 0 or nb % G == 0), \
        "group size must respect the (batch, head, image-block) ordering"
    grid = BH // G

    # mask shaped so each grid step sees its (periodic) slice with a cheap map
    mask_rows = max(G, nb)
    mask_arr = jnp.tile(valid_blk, (mask_rows // nb, 1)).reshape(mask_rows, 1, n_k)
    nmb = mask_rows // G
    if nmb == 1:
        mask_imap = lambda i: (0, 0, 0)
    else:
        mask_imap = lambda i, _n=nmb: (i % _n, 0, 0)

    const_bytes = (tile_c.size + C.size) * 2 + (qsel.size + mask_arr.size) * 4
    need = 2 * G * per_prob + const_bytes + (2 << 20)
    vmem_limit = int(min(max(2 * need, 16 << 20), max(16 << 20, vmem_cap // 2)))

    kernel = functools.partial(_halo_attn_kernel, scale=scale)
    out = pl.pallas_call(
        kernel,
        out_shape=jax.ShapeDtypeStruct((BH, n_q, dim_head), x.dtype),
        grid_spec=pltpu.PrefetchScalarGridSpec(
            num_scalar_prefetch=0,
            grid=(grid,),
            in_specs=[
                pl.BlockSpec((G, n_q, dim_head), lambda i: (i, 0, 0)),
                pl.BlockSpec((G, dim_head, n_k), lambda i: (i, 0, 0)),
                pl.BlockSpec((G, dim_head, n_k), lambda i: (i, 0, 0)),
                pl.BlockSpec((dim_head, L), lambda i: (0, 0)),   # TILE  (constant)
                pl.BlockSpec((n_q, L), lambda i: (0, 0)),        # QSEL  (constant)
                pl.BlockSpec((L, n_k), lambda i: (0, 0)),        # C     (constant)
                pl.BlockSpec((G, 1, n_k), mask_imap),            # mask  (periodic)
            ],
            out_specs=pl.BlockSpec((G, n_q, dim_head), lambda i: (i, 0, 0)),
        ),
        compiler_params=pltpu.CompilerParams(
            dimension_semantics=("parallel",),
            vmem_limit_bytes=vmem_limit),
    )(qh, kt, vt, tile_c, qsel, C, mask_arr)

    # undo (batch, head, block) ordering, merge heads, to_out, un-blockify
    out = (out.reshape(b, heads, nb, n_q, dim_head)
              .transpose(0, 2, 3, 1, 4)
              .reshape(b * nb, n_q, inner))
    out = out @ params['w_out'].T + params['b_out']
    out = (out.reshape(b, nh, nw, block, block, c)
              .transpose(0, 5, 1, 3, 2, 4)
              .reshape(b, c, h, w))
    return out


# ----------------------------------------------------------------------------
# Pure-JAX reference (direct translation of the torch code) for self-check
# ----------------------------------------------------------------------------
def _extract_ref(x, params, *, block, halo):
    b, c, h, w = x.shape
    K = block + 2 * halo
    nh, nw = h // block, w // block
    nb = nh * nw

    q_inp = x.reshape(b, c, nh, block, nw, block)
    q_inp = q_inp.transpose(0, 2, 4, 3, 5, 1).reshape(b * nb, block * block, c)

    x_pad = jnp.pad(x, ((0, 0), (0, 0), (halo, halo), (halo, halo)))
    row = jnp.arange(nh)[:, None] * block + jnp.arange(K)[None, :]
    col = jnp.arange(nw)[:, None] * block + jnp.arange(K)[None, :]
    tmp = x_pad[:, :, row, :]
    patches = tmp[:, :, :, :, col]
    kv_inp = patches.transpose(0, 2, 4, 3, 5, 1).reshape(b * nb, K * K, c)

    inner = params['w_q'].shape[0]
    q_proj = q_inp @ params['w_q'].T
    kv = kv_inp @ params['w_kv'].T
    return q_proj, kv[..., :inner], kv[..., inner:], (b, c, h, w, nh, nw, nb, K)


def _rel_to_abs(x):
    b, l, m = x.shape
    r = (m + 1) // 2
    x = jnp.concatenate([x, jnp.zeros((b, l, 1), x.dtype)], axis=2)
    flat = x.reshape(b, l * (m + 1))
    flat = jnp.concatenate([flat, jnp.zeros((b, m - l), x.dtype)], axis=1)
    final = flat.reshape(b, l + 1, m)
    return final[:, :l, -r:]


def _relative_logits_1d(q, rel_k):
    b, hh, ww, _ = q.shape
    r = (rel_k.shape[0] + 1) // 2
    logits = jnp.einsum('bxyd,rd->bxyr', q, rel_k)
    logits = logits.reshape(b * hh, ww, -1)
    logits = _rel_to_abs(logits)
    logits = logits.reshape(b, hh, ww, r)
    return jnp.broadcast_to(logits[:, :, None, :, :], (b, hh, r, ww, r))


def _rel_pos_emb_ref(q, rel_height, rel_width, block):
    B, n, d = q.shape
    qq = q.reshape(B, block, block, d)
    lw = _relative_logits_1d(qq, rel_width)
    lw = lw.transpose(0, 1, 3, 2, 4).reshape(B, n, -1)
    qt = qq.transpose(0, 2, 1, 3)
    lh = _relative_logits_1d(qt, rel_height)
    lh = lh.transpose(0, 3, 1, 4, 2).reshape(B, n, -1)
    return lw + lh


def halo_attention_ref(x, params, *, block, halo, heads, dim_head):
    q_proj, k_proj, v_proj, dims = _extract_ref(x, params, block=block, halo=halo)
    b, c, h, w, nh, nw, nb, K = dims
    inner = heads * dim_head
    n_q, n_k = block * block, K * K

    def split_heads(t):
        B, n, _ = t.shape
        return (t.reshape(B, n, heads, dim_head)
                 .transpose(0, 2, 1, 3)
                 .reshape(B * heads, n, dim_head))
    q, k, v = map(split_heads, (q_proj, k_proj, v_proj))

    scale = dim_head ** -0.5
    q = q * scale
    sim = jnp.einsum('bid,bjd->bij', q, k)
    sim = sim + _rel_pos_emb_ref(q, params['rel_height'], params['rel_width'], block)

    prow = jnp.arange(nh)[:, None] * block - halo + jnp.arange(K)[None, :]
    pcol = jnp.arange(nw)[:, None] * block - halo + jnp.arange(K)[None, :]
    rvalid = (prow >= 0) & (prow < h)
    cvalid = (pcol >= 0) & (pcol < w)
    mask_block = (rvalid[:, None, :, None] & cvalid[None, :, None, :]).reshape(nb, n_k)
    mask_full = jnp.broadcast_to(mask_block[None, :, None, :],
                                 (b, nb, heads, n_k)).reshape(b * nb * heads, n_k)

    neg = -jnp.finfo(sim.dtype).max
    sim = jnp.where(mask_full[:, None, :], neg, sim)   # faithful masked_fill_
    attn = jax.nn.softmax(sim, axis=-1)
    out = jnp.einsum('bij,bjd->bid', attn, v)

    out = (out.reshape(b * nb, heads, n_q, dim_head)
              .transpose(0, 2, 1, 3)
              .reshape(b * nb, n_q, inner))
    out = out @ params['w_out'].T + params['b_out']
    out = (out.reshape(b, nh, nw, block, block, c)
              .transpose(0, 5, 1, 3, 2, 4)
              .reshape(b, c, h, w))
    return out


# ----------------------------------------------------------------------------
if __name__ == "__main__":
    b, dim, h, w = 2, 32, 16, 16
    block, halo, heads, dim_head = 4, 2, 2, 16

    key = jax.random.PRNGKey(0)
    kx, kp = jax.random.split(key)
    x = jax.random.normal(kx, (b, dim, h, w), jnp.float32)
    params = init_params(kp, dim=dim, block=block, halo=halo,
                         dim_head=dim_head, heads=heads)

    fwd = jax.jit(functools.partial(halo_attention_forward, block=block,
                                    halo=halo, heads=heads, dim_head=dim_head))
    out = jax.block_until_ready(fwd(x, params))

    ref = jax.block_until_ready(
        halo_attention_ref(x, params, block=block, halo=halo,
                           heads=heads, dim_head=dim_head))

    assert out.shape == (b, dim, h, w) and out.dtype == jnp.float32
    # bf16 MXU operands (with f32 accumulation / f32 softmax) + EUP approx
    # reciprocal => tolerance loosened vs the all-f32 reference.
    np.testing.assert_allclose(np.asarray(out), np.asarray(ref),
                               rtol=5e-2, atol=5e-2)
    print("KERNEL_OK")
</pallas_src>

<mosaic_0001>
module attributes {stable_mosaic.version = 11 : i64} {
  func.func @_halo_attn_kernel(%arg0: i32, %arg1: memref<16x16x16xbf16, #tpu.memory_space<vmem>>, %arg2: memref<16x16x64xbf16, #tpu.memory_space<vmem>>, %arg3: memref<16x16x64xbf16, #tpu.memory_space<vmem>>, %arg4: memref<16x128xbf16, #tpu.memory_space<vmem>>, %arg5: memref<16x128xf32, #tpu.memory_space<vmem>>, %arg6: memref<128x64xbf16, #tpu.memory_space<vmem>>, %arg7: memref<16x1x64xf32, #tpu.memory_space<vmem>>, %arg8: memref<16x16x16xf32, #tpu.memory_space<vmem>>) attributes {dimension_semantics = [#tpu.dimension_semantics<parallel>], iteration_bounds = array<i64: 4>, scalar_prefetch = 0 : i64, scratch_operands = 0 : i64, tpu.core_type = #tpu.core_type<tc>, window_params = [{transform_indices = @transform_0, window_bounds = array<i64: 16, 16, 16>}, {transform_indices = @transform_1, window_bounds = array<i64: 16, 16, 64>}, {transform_indices = @transform_2, window_bounds = array<i64: 16, 16, 64>}, {pipeline_mode = #tpu.pipeline_mode<synchronous>, transform_indices = @transform_3, window_bounds = array<i64: 16, 128>}, {pipeline_mode = #tpu.pipeline_mode<synchronous>, transform_indices = @transform_4, window_bounds = array<i64: 16, 128>}, {pipeline_mode = #tpu.pipeline_mode<synchronous>, transform_indices = @transform_5, window_bounds = array<i64: 128, 64>}, {pipeline_mode = #tpu.pipeline_mode<synchronous>, transform_indices = @transform_6, window_bounds = array<i64: 16, 1, 64>}, {transform_indices = @transform_7, window_bounds = array<i64: 16, 16, 16>}]} {
    %c0 = arith.constant 0 : index
    %c0_0 = arith.constant 0 : index
    %c0_1 = arith.constant 0 : index
    %0 = vector.load %arg1[%c0, %c0_0, %c0_1] : memref<16x16x16xbf16, #tpu.memory_space<vmem>>, vector<16x16x16xbf16>
    %c0_2 = arith.constant 0 : index
    %c0_3 = arith.constant 0 : index
    %c0_4 = arith.constant 0 : index
    %1 = vector.load %arg2[%c0_2, %c0_3, %c0_4] : memref<16x16x64xbf16, #tpu.memory_space<vmem>>, vector<16x16x64xbf16>
    %cst = arith.constant dense<0.000000e+00> : vector<16x16x64xf32>
    %2 = tpu.matmul %0, %1, %cst {dimension_numbers = #tpu.dot_dimension_numbers<[2], [1], [1], [2], [0, 0, 0, 1, 1, 2], [0], [0]>} : vector<16x16x16xbf16>, vector<16x16x64xbf16>, vector<16x16x64xf32> -> vector<16x16x64xf32>
    %3 = vector.shape_cast %0 : vector<16x16x16xbf16> to vector<256x16xbf16>
    %c0_5 = arith.constant 0 : index
    %c0_6 = arith.constant 0 : index
    %4 = vector.load %arg4[%c0_5, %c0_6] : memref<16x128xbf16, #tpu.memory_space<vmem>>, vector<16x128xbf16>
    %cst_7 = arith.constant dense<0.000000e+00> : vector<256x128xf32>
    %5 = tpu.matmul %3, %4, %cst_7 {dimension_numbers = #tpu.dot_dimension_numbers<[1], [0], [0], [1], [0, 0, 1, 1], [], []>} : vector<256x16xbf16>, vector<16x128xbf16>, vector<256x128xf32> -> vector<256x128xf32>
    %6 = vector.shape_cast %5 : vector<256x128xf32> to vector<16x16x128xf32>
    %c0_8 = arith.constant 0 : index
    %c0_9 = arith.constant 0 : index
    %7 = vector.load %arg5[%c0_8, %c0_9] : memref<16x128xf32, #tpu.memory_space<vmem>>, vector<16x128xf32>
    %8 = vector.shape_cast %7 : vector<16x128xf32> to vector<1x16x128xf32>
    %9 = vector.broadcast %8 : vector<1x16x128xf32> to vector<16x16x128xf32>
    %10 = arith.mulf %6, %9 : vector<16x16x128xf32>
    %11 = vector.shape_cast %10 : vector<16x16x128xf32> to vector<256x128xf32>
    %12 = arith.truncf %11 : vector<256x128xf32> to vector<256x128xbf16>
    %c0_10 = arith.constant 0 : index
    %c0_11 = arith.constant 0 : index
    %13 = vector.load %arg6[%c0_10, %c0_11] : memref<128x64xbf16, #tpu.memory_space<vmem>>, vector<128x64xbf16>
    %cst_12 = arith.constant dense<0.000000e+00> : vector<256x64xf32>
    %14 = tpu.matmul %12, %13, %cst_12 {dimension_numbers = #tpu.dot_dimension_numbers<[1], [0], [0], [1], [0, 0, 1, 1], [], []>} : vector<256x128xbf16>, vector<128x64xbf16>, vector<256x64xf32> -> vector<256x64xf32>
    %15 = vector.shape_cast %14 : vector<256x64xf32> to vector<16x16x64xf32>
    %16 = arith.addf %2, %15 : vector<16x16x64xf32>
    %cst_13 = arith.constant 2.500000e-01 : f32
    %17 = vector.broadcast %cst_13 : f32 to vector<16x16x64xf32>
    %18 = arith.mulf %16, %17 : vector<16x16x64xf32>
    %c0_14 = arith.constant 0 : index
    %c0_15 = arith.constant 0 : index
    %c0_16 = arith.constant 0 : index
    %19 = vector.load %arg7[%c0_14, %c0_15, %c0_16] : memref<16x1x64xf32, #tpu.memory_space<vmem>>, vector<16x1x64xf32>
    %cst_17 = arith.constant 5.000000e-01 : f32
    %20 = vector.broadcast %cst_17 : f32 to vector<16x1x64xf32>
    %21 = arith.cmpf ogt, %19, %20 : vector<16x1x64xf32>
    %cst_18 = arith.constant -3.40282347E+38 : f32
    %22 = vector.shape_cast %21 : vector<16x1x64xi1> to vector<16x1x64xi1>
    %23 = vector.broadcast %22 : vector<16x1x64xi1> to vector<16x16x64xi1>
    %24 = vector.broadcast %cst_18 : f32 to vector<16x16x64xf32>
    %25 = arith.select %23, %24, %18 : vector<16x16x64xi1>, vector<16x16x64xf32>
    %cst_19 = arith.constant dense<0xFF800000> : vector<16x16xf32>
    %26 = vector.multi_reduction <maximumf>, %25, %cst_19 [2] : vector<16x16x64xf32> to vector<16x16xf32>
    %27 = vector.shape_cast %26 : vector<16x16xf32> to vector<16x16x1xf32>
    %28 = vector.broadcast %27 : vector<16x16x1xf32> to vector<16x16x64xf32>
    %29 = arith.subf %25, %28 : vector<16x16x64xf32>
    %30 = math.exp %29 : vector<16x16x64xf32>
    %cst_20 = arith.constant dense<0.000000e+00> : vector<16x16xf32>
    %31 = vector.multi_reduction <add>, %30, %cst_20 [2] : vector<16x16x64xf32> to vector<16x16xf32>
    %32 = vector.shape_cast %31 : vector<16x16xf32> to vector<16x16x1xf32>
    %33 = arith.truncf %30 : vector<16x16x64xf32> to vector<16x16x64xbf16>
    %c0_21 = arith.constant 0 : index
    %c0_22 = arith.constant 0 : index
    %c0_23 = arith.constant 0 : index
    %34 = vector.load %arg3[%c0_21, %c0_22, %c0_23] : memref<16x16x64xbf16, #tpu.memory_space<vmem>>, vector<16x16x64xbf16>
    %cst_24 = arith.constant dense<0.000000e+00> : vector<16x16x16xf32>
    %35 = tpu.matmul %33, %34, %cst_24 {dimension_numbers = #tpu.dot_dimension_numbers<[2], [2], [1], [1], [0, 0, 0, 1, 1, 1], [0], [0]>} : vector<16x16x64xbf16>, vector<16x16x64xbf16>, vector<16x16x16xf32> -> vector<16x16x16xf32>
    %36 = tpu.reciprocal %32 {approx = true} : vector<16x16x1xf32> -> vector<16x16x1xf32>
    %37 = vector.broadcast %36 : vector<16x16x1xf32> to vector<16x16x16xf32>
    %38 = arith.mulf %35, %37 : vector<16x16x16xf32>
    %c0_25 = arith.constant 0 : index
    %c0_26 = arith.constant 0 : index
    %c0_27 = arith.constant 0 : index
    %39 = vector.load %arg8[%c0_25, %c0_26, %c0_27] : memref<16x16x16xf32, #tpu.memory_space<vmem>>, vector<16x16x16xf32>
    tpu.vector_store %arg8[%c0_25, %c0_26, %c0_27], %38 {strides = array<i32>} : memref<16x16x16xf32, #tpu.memory_space<vmem>>, vector<16x16x16xf32>,
    return
  }
  func.func @transform_0(%arg0: i32) -> (i32, i32, i32) {
    %c0_i32 = arith.constant 0 : i32
    %c0_i32_0 = arith.constant 0 : i32
    %c0_i32_1 = arith.constant 0 : i32
    return %arg0, %c0_i32, %c0_i32_0 : i32, i32, i32
  }
  func.func @transform_1(%arg0: i32) -> (i32, i32, i32) {
    %c0_i32 = arith.constant 0 : i32
    %c0_i32_0 = arith.constant 0 : i32
    %c0_i32_1 = arith.constant 0 : i32
    return %arg0, %c0_i32, %c0_i32_0 : i32, i32, i32
  }
  func.func @transform_2(%arg0: i32) -> (i32, i32, i32) {
    %c0_i32 = arith.constant 0 : i32
    %c0_i32_0 = arith.constant 0 : i32
    %c0_i32_1 = arith.constant 0 : i32
    return %arg0, %c0_i32, %c0_i32_0 : i32, i32, i32
  }
  func.func @transform_3(%arg0: i32) -> (i32, i32) {
    %c0_i32 = arith.constant 0 : i32
    %c0_i32_0 = arith.constant 0 : i32
    %c0_i32_1 = arith.constant 0 : i32
    return %c0_i32, %c0_i32_0 : i32, i32
  }
  func.func @transform_4(%arg0: i32) -> (i32, i32) {
    %c0_i32 = arith.constant 0 : i32
    %c0_i32_0 = arith.constant 0 : i32
    %c0_i32_1 = arith.constant 0 : i32
    return %c0_i32, %c0_i32_0 : i32, i32
  }
  func.func @transform_5(%arg0: i32) -> (i32, i32) {
    %c0_i32 = arith.constant 0 : i32
    %c0_i32_0 = arith.constant 0 : i32
    %c0_i32_1 = arith.constant 0 : i32
    return %c0_i32, %c0_i32_0 : i32, i32
  }
  func.func @transform_6(%arg0: i32) -> (i32, i32, i32) {
    %c0_i32 = arith.constant 0 : i32
    %c0_i32_0 = arith.constant 0 : i32
    %c0_i32_1 = arith.constant 0 : i32
    %c0_i32_2 = arith.constant 0 : i32
    return %c0_i32, %c0_i32_0, %c0_i32_1 : i32, i32, i32
  }
  func.func @transform_7(%arg0: i32) -> (i32, i32, i32) {
    %c0_i32 = arith.constant 0 : i32
    %c0_i32_0 = arith.constant 0 : i32
    %c0_i32_1 = arith.constant 0 : i32
    return %arg0, %c0_i32, %c0_i32_0 : i32, i32, i32
  }
}

</mosaic_0001>

<llo_original>
// kernel: halo_attention_forward.1
$region0: #{halo_attention_forward.1}
  #allocation0 [shape = 'u32[]', space=smem, size = 0x4, offset = 0x4, fixed_abs, tag = 'smem constant byte address 0x4 - core index']
  #allocation1 [shape = 'u32[72,128]{1,0:T(1,128)}', space=vmem, size = 0x9000, scoped, tag = 'internal scratch']
  %s0 = inlined_call_operand.vmem [shape: bf16[64,16,16], index: 0, kind: input, shape index: {}]
  %s1 = inlined_call_operand.vmem [shape: bf16[64,16,64], index: 1, kind: input, shape index: {}]
  %s2 = inlined_call_operand.vmem [shape: bf16[64,16,64], index: 2, kind: input, shape index: {}]
  %s3 = inlined_call_operand.vmem [shape: bf16[16,128], index: 3, kind: input, shape index: {}]
  %s4 = inlined_call_operand.vmem [shape: f32[16,128], index: 4, kind: input, shape index: {}]
  %s5 = inlined_call_operand.vmem [shape: bf16[128,64], index: 5, kind: input, shape index: {}]
  %s6 = inlined_call_operand.vmem [shape: f32[16,1,64], index: 6, kind: input, shape index: {}]
  %s7 = inlined_call_operand.vmem [shape: f32[64,16,16], index: 7, kind: output, shape index: {}]
  %s8 = sld [smem:[#allocation0]]
  $region61: #{halo_attention_forward.1} parent=0
    _
  %s10 = ssub.s32 1, %s8
  %s11 = scalar_select 0, %s10, %s8
  loop: start=0, step=1, limit=6
  $region2: #{halo_attention_forward.1} parent=0 // loop_pre_header
    _
  $region3: #{halo_attention_forward.1} parent=0 // loop_header
    %s13 = sphi 0, %s17
    %p14 = scmp.ge.s32.totalorder %s13, 6
    %s23 = sphi 0, %s25
    %s26 = sphi 0, %s23
    %s27 = sphi 0, %s26
    %s43 = sphi 0, %s27
    %s49 = sphi 0, %s51
    %s52 = sphi 0, %s49
    %s53 = sphi 0, %s52
    %s69 = sphi 0, %s53
    %s75 = sphi 0, %s77
    %s78 = sphi 0, %s75
    %s79 = sphi 0, %s78
    %s95 = sphi 0, %s79
    %s99 = sphi 0, %s99
    %s101 = sphi 0, %s99
    %s102 = sphi 0, %s101
    %s116 = sphi 0, %s102
    %s120 = sphi 0, %s120
    %s122 = sphi 0, %s120
    %s123 = sphi 0, %s122
    %s137 = sphi 0, %s123
    %s141 = sphi 0, %s141
    %s143 = sphi 0, %s141
    %s144 = sphi 0, %s143
    %s158 = sphi 0, %s144
    %s162 = sphi 0, %s162
    %s164 = sphi 0, %s162
    %s165 = sphi 0, %s164
    %s179 = sphi 0, %s165
    %s185 = sphi 0, %s187
    %s188 = sphi 0, %s185
    %s189 = sphi 0, %s188
    %s205 = sphi 0, %s189
  $region4: #{halo_attention_forward.1} parent=0 // loop_header_branch
    %16 = sbr.rel (%p14) target = $region8
  $region5: #{halo_attention_forward.1} parent=0 // loop_body
    %s18 = ssub.s32 %s13, 1
    %s19 = ssub.s32 %s13, 2
    %s20 = sadd.s32 %s13, 1
    %s21 = ssub.s32 %s13, %s20
    %p22 = scmp.eq.s32.totalorder %s21, 0
    %s24 = sadd.s32 %s23, 1
    %s25 = scalar_select %p22, %s23, %s24
    %p28 = pneg %p22
    %p29 = scmp.eq.s32.totalorder %s13, 3
    %p30 = por %p28, %p29
    %p31 = scmp.ne.s32.totalorder %s23, %s26
    %p32 = scmp.eq.s32.totalorder %s13, 0
    %p33 = por %p31, %p32
    %p34 = scmp.ne.s32.totalorder %s23, %s26
    %p35 = scmp.eq.s32.totalorder %s18, 3
    %p36 = por %p34, %p35
    %p37 = scmp.ne.s32.totalorder %s26, %s27
    %p38 = scmp.eq.s32.totalorder %s18, 0
    %p39 = por %p37, %p38
    %p40 = scmp.ne.s32.totalorder %s26, %s27
    %p41 = scmp.eq.s32.totalorder %s19, 3
    %p42 = por %p40, %p41
    %p44 = scmp.ne.s32.totalorder %s27, %s43
    %p45 = scmp.eq.s32.totalorder %s19, 0
    %p46 = por %p44, %p45
    %s47 = ssub.s32 %s13, %s20
    %p48 = scmp.eq.s32.totalorder %s47, 0
    %s50 = sadd.s32 %s49, 1
    %s51 = scalar_select %p48, %s49, %s50
    %p54 = pneg %p48
    %p55 = scmp.eq.s32.totalorder %s13, 3
    %p56 = por %p54, %p55
    %p57 = scmp.ne.s32.totalorder %s49, %s52
    %p58 = scmp.eq.s32.totalorder %s13, 0
    %p59 = por %p57, %p58
    %p60 = scmp.ne.s32.totalorder %s49, %s52
    %p61 = scmp.eq.s32.totalorder %s18, 3
    %p62 = por %p60, %p61
    %p63 = scmp.ne.s32.totalorder %s52, %s53
    %p64 = scmp.eq.s32.totalorder %s18, 0
    %p65 = por %p63, %p64
    %p66 = scmp.ne.s32.totalorder %s52, %s53
    %p67 = scmp.eq.s32.totalorder %s19, 3
    %p68 = por %p66, %p67
    %p70 = scmp.ne.s32.totalorder %s53, %s69
    %p71 = scmp.eq.s32.totalorder %s19, 0
    %p72 = por %p70, %p71
    %s73 = ssub.s32 %s13, %s20
    %p74 = scmp.eq.s32.totalorder %s73, 0
    %s76 = sadd.s32 %s75, 1
    %s77 = scalar_select %p74, %s75, %s76
    %p80 = pneg %p74
    %p81 = scmp.eq.s32.totalorder %s13, 3
    %p82 = por %p80, %p81
    %p83 = scmp.ne.s32.totalorder %s75, %s78
    %p84 = scmp.eq.s32.totalorder %s13, 0
    %p85 = por %p83, %p84
    %p86 = scmp.ne.s32.totalorder %s75, %s78
    %p87 = scmp.eq.s32.totalorder %s18, 3
    %p88 = por %p86, %p87
    %p89 = scmp.ne.s32.totalorder %s78, %s79
    %p90 = scmp.eq.s32.totalorder %s18, 0
    %p91 = por %p89, %p90
    %p92 = scmp.ne.s32.totalorder %s78, %s79
    %p93 = scmp.eq.s32.totalorder %s19, 3
    %p94 = por %p92, %p93
    %p96 = scmp.ne.s32.totalorder %s79, %s95
    %p97 = scmp.eq.s32.totalorder %s19, 0
    %p98 = por %p96, %p97
    %s100 = sadd.s32 %s99, 1
    %p103 = scmp.eq.s32.totalorder %s13, 3
    %p104 = scmp.ne.s32.totalorder %s99, %s101
    %p105 = scmp.eq.s32.totalorder %s13, 0
    %p106 = por %p104, %p105
    %p107 = scmp.ne.s32.totalorder %s99, %s101
    %p108 = scmp.eq.s32.totalorder %s18, 3
    %p109 = por %p107, %p108
    %p110 = scmp.ne.s32.totalorder %s101, %s102
    %p111 = scmp.eq.s32.totalorder %s18, 0
    %p112 = por %p110, %p111
    %p113 = scmp.ne.s32.totalorder %s101, %s102
    %p114 = scmp.eq.s32.totalorder %s19, 3
    %p115 = por %p113, %p114
    %p117 = scmp.ne.s32.totalorder %s102, %s116
    %p118 = scmp.eq.s32.totalorder %s19, 0
    %p119 = por %p117, %p118
    %s121 = sadd.s32 %s120, 1
    %p124 = scmp.eq.s32.totalorder %s13, 3
    %p125 = scmp.ne.s32.totalorder %s120, %s122
    %p126 = scmp.eq.s32.totalorder %s13, 0
    %p127 = por %p125, %p126
    %p128 = scmp.ne.s32.totalorder %s120, %s122
    %p129 = scmp.eq.s32.totalorder %s18, 3
    %p130 = por %p128, %p129
    %p131 = scmp.ne.s32.totalorder %s122, %s123
    %p132 = scmp.eq.s32.totalorder %s18, 0
    %p133 = por %p131, %p132
    %p134 = scmp.ne.s32.totalorder %s122, %s123
    %p135 = scmp.eq.s32.totalorder %s19, 3
    %p136 = por %p134, %p135
    %p138 = scmp.ne.s32.totalorder %s123, %s137
    %p139 = scmp.eq.s32.totalorder %s19, 0
    %p140 = por %p138, %p139
    %s142 = sadd.s32 %s141, 1
    %p145 = scmp.eq.s32.totalorder %s13, 3
    %p146 = scmp.ne.s32.totalorder %s141, %s143
    %p147 = scmp.eq.s32.totalorder %s13, 0
    %p148 = por %p146, %p147
    %p149 = scmp.ne.s32.totalorder %s141, %s143
    %p150 = scmp.eq.s32.totalorder %s18, 3
    %p151 = por %p149, %p150
    %p152 = scmp.ne.s32.totalorder %s143, %s144
    %p153 = scmp.eq.s32.totalorder %s18, 0
    %p154 = por %p152, %p153
    %p155 = scmp.ne.s32.totalorder %s143, %s144
    %p156 = scmp.eq.s32.totalorder %s19, 3
    %p157 = por %p155, %p156
    %p159 = scmp.ne.s32.totalorder %s144, %s158
    %p160 = scmp.eq.s32.totalorder %s19, 0
    %p161 = por %p159, %p160
    %s163 = sadd.s32 %s162, 1
    %p166 = scmp.eq.s32.totalorder %s13, 3
    %p167 = scmp.ne.s32.totalorder %s162, %s164
    %p168 = scmp.eq.s32.totalorder %s13, 0
    %p169 = por %p167, %p168
    %p170 = scmp.ne.s32.totalorder %s162, %s164
    %p171 = scmp.eq.s32.totalorder %s18, 3
    %p172 = por %p170, %p171
    %p173 = scmp.ne.s32.totalorder %s164, %s165
    %p174 = scmp.eq.s32.totalorder %s18, 0
    %p175 = por %p173, %p174
    %p176 = scmp.ne.s32.totalorder %s164, %s165
    %p177 = scmp.eq.s32.totalorder %s19, 3
    %p178 = por %p176, %p177
    %p180 = scmp.ne.s32.totalorder %s165, %s179
    %p181 = scmp.eq.s32.totalorder %s19, 0
    %p182 = por %p180, %p181
    %s183 = ssub.s32 %s13, %s20
    %p184 = scmp.eq.s32.totalorder %s183, 0
    %s186 = sadd.s32 %s185, 1
    %s187 = scalar_select %p184, %s185, %s186
    %p190 = pneg %p184
    %p191 = scmp.eq.s32.totalorder %s13, 3
    %p192 = por %p190, %p191
    %p193 = scmp.ne.s32.totalorder %s185, %s188
    %p194 = scmp.eq.s32.totalorder %s13, 0
    %p195 = por %p193, %p194
    %p196 = scmp.ne.s32.totalorder %s185, %s188
    %p197 = scmp.eq.s32.totalorder %s18, 3
    %p198 = por %p196, %p197
    %p199 = scmp.ne.s32.totalorder %s188, %s189
    %p200 = scmp.eq.s32.totalorder %s18, 0
    %p201 = por %p199, %p200
    %p202 = scmp.ne.s32.totalorder %s188, %s189
    %p203 = scmp.eq.s32.totalorder %s19, 3
    %p204 = por %p202, %p203
    %p206 = scmp.ne.s32.totalorder %s189, %s205
    %p207 = scmp.eq.s32.totalorder %s19, 0
    %p208 = por %p206, %p207
    %p209 = scmp.le.s32.totalorder 1, %s13
    %p210 = scmp.lt.s32.totalorder %s13, 5
    %p211 = pnand %p209, %p210
    %p212 = pneg %p211
    // Predicated region
    $region9: #{halo_attention_forward.1} parent=5 // pred_check
      _
    $region10: #{halo_attention_forward.1} parent=5 // pred_check_branch
      %214 = sbr.rel (%p211) target = $region12
    $region11: #{halo_attention_forward.1} parent=5 // pred_region
      %s215 = ssub.s32 %s13, 1
      // Predicated region
      $region13: #{halo_attention_forward.1} parent=11 // pred_check
        %p216 = pneg %p112
      $region14: #{halo_attention_forward.1} parent=11 // pred_check_branch
        %218 = sbr.rel (%p216) target = $region16
      $region15: #{halo_attention_forward.1} parent=11 // pred_region
        _
      $region16: #{halo_attention_forward.1} parent=11 // pred_fallthru
        _
      // Predicated region
      $region17: #{halo_attention_forward.1} parent=11 // pred_check
        %p219 = pneg %p133
      $region18: #{halo_attention_forward.1} parent=11 // pred_check_branch
        %221 = sbr.rel (%p219) target = $region20
      $region19: #{halo_attention_forward.1} parent=11 // pred_region
        _
      $region20: #{halo_attention_forward.1} parent=11 // pred_fallthru
        _
      // Predicated region
      $region21: #{halo_attention_forward.1} parent=11 // pred_check
        %p222 = pneg %p154
      $region22: #{halo_attention_forward.1} parent=11 // pred_check_branch
        %224 = sbr.rel (%p222) target = $region24
      $region23: #{halo_attention_forward.1} parent=11 // pred_region
        _
      $region24: #{halo_attention_forward.1} parent=11 // pred_fallthru
        _
      // Predicated region
      $region25: #{halo_attention_forward.1} parent=11 // pred_check
        %p225 = pneg %p175
      $region26: #{halo_attention_forward.1} parent=11 // pred_check_branch
        %227 = sbr.rel (%p225) target = $region28
      $region27: #{halo_attention_forward.1} parent=11 // pred_region
        _
      $region28: #{halo_attention_forward.1} parent=11 // pred_fallthru
        _
    $region12: #{halo_attention_forward.1} parent=5 // pred_fallthru
      _
    %p228 = scmp.lt.s32.totalorder %s13, 4
    // Predicated region
    $region29: #{halo_attention_forward.1} parent=5 // pred_check
      %p229 = pneg %p228
    $region30: #{halo_attention_forward.1} parent=5 // pred_check_branch
      %231 = sbr.rel (%p229) target = $region32
    $region31: #{halo_attention_forward.1} parent=5 // pred_region
      // Predicated region
      $region33: #{halo_attention_forward.1} parent=31 // pred_check
        %p232 = pneg %p33
      $region34: #{halo_attention_forward.1} parent=31 // pred_check_branch
        %234 = sbr.rel (%p232) target = $region36
      $region35: #{halo_attention_forward.1} parent=31 // pred_region
        %s235 = smul.u32 16, %s13
        %p236 = scmp.lt.s32.totalorder %s235, 63
        %s237 = scalar_select %p236, %s235, 63
        %s238 = smul.addr %s237, 2
        %s239 = smul.addr %s238, 4
        %s240 = scalar_lea.vmem %s0, %s239
        %s241 = smul.u32 16, %s13
      $region36: #{halo_attention_forward.1} parent=31 // pred_fallthru
        _
      // Predicated region
      $region37: #{halo_attention_forward.1} parent=31 // pred_check
        %p242 = pneg %p59
      $region38: #{halo_attention_forward.1} parent=31 // pred_check_branch
        %244 = sbr.rel (%p242) target = $region40
      $region39: #{halo_attention_forward.1} parent=31 // pred_region
        %s245 = smul.u32 16, %s13
        %p246 = scmp.lt.s32.totalorder %s245, 63
        %s247 = scalar_select %p246, %s245, 63
        %s248 = smul.addr %s247, 2
        %s249 = smul.addr %s248, 4
        %s250 = scalar_lea.vmem %s1, %s249
        %s251 = smul.u32 16, %s13
      $region40: #{halo_attention_forward.1} parent=31 // pred_fallthru
        _
      // Predicated region
      $region41: #{halo_attention_forward.1} parent=31 // pred_check
        %p252 = pneg %p85
      $region42: #{halo_attention_forward.1} parent=31 // pred_check_branch
        %254 = sbr.rel (%p252) target = $region44
      $region43: #{halo_attention_forward.1} parent=31 // pred_region
        %s255 = smul.u32 16, %s13
        %p256 = scmp.lt.s32.totalorder %s255, 63
        %s257 = scalar_select %p256, %s255, 63
        %s258 = smul.addr %s257, 2
        %s259 = smul.addr %s258, 4
        %s260 = scalar_lea.vmem %s2, %s259
        %s261 = smul.u32 16, %s13
      $region44: #{halo_attention_forward.1} parent=31 // pred_fallthru
        _
    $region32: #{halo_attention_forward.1} parent=5 // pred_fallthru
      _
    %p262 = scmp.le.s32.totalorder 1, %s13
    %p263 = scmp.lt.s32.totalorder %s13, 5
    %p264 = pnand %p262, %p263
    %p265 = pneg %p264
    // Predicated region
    $region45: #{halo_attention_forward.1} parent=5 // pred_check
      _
    $region46: #{halo_attention_forward.1} parent=5 // pred_check_branch
      %267 = sbr.rel (%p264) target = $region48
    $region47: #{halo_attention_forward.1} parent=5 // pred_region
      %s268 = ssub.s32 %s13, 1
      %s269 = smul.u32 16, %s18
      %p270 = scmp.lt.s32.totalorder %s269, 63
      %s271 = scalar_select %p270, %s269, 63
      %s272 = smul.addr %s271, 2
      %s273 = smul.addr %s272, 4
      %s274 = scalar_lea.vmem %s0, %s273
      %p275 = pneg %p39
      %p276 = pneg %p36
      %s277 = smul.u32 16, %s18
      %p278 = scmp.lt.s32.totalorder %s277, 63
      %s279 = scalar_select %p278, %s277, 63
      %s280 = smul.addr %s279, 2
      %s281 = smul.addr %s280, 4
      %s282 = scalar_lea.vmem %s1, %s281
      %p283 = pneg %p65
      %p284 = pneg %p62
      %s285 = smul.u32 16, %s18
      %p286 = scmp.lt.s32.totalorder %s285, 63
      %s287 = scalar_select %p286, %s285, 63
      %s288 = smul.addr %s287, 2
      %s289 = smul.addr %s288, 4
      %s290 = scalar_lea.vmem %s2, %s289
      %p291 = pneg %p91
      %p292 = pneg %p88
      %p293 = pneg %p112
      %p294 = pneg %p109
      %p295 = pneg %p133
      %p296 = pneg %p130
      %p297 = pneg %p154
      %p298 = pneg %p151
      %p299 = pneg %p175
      %p300 = pneg %p172
      %p301 = pneg %p201
      %p302 = pneg %p198
      %s303 = smul.u32 16, %s18
      %p304 = scmp.lt.s32.totalorder %s303, 63
      %s305 = scalar_select %p304, %s303, 63
      %s306 = smul.addr %s305, 2
      %s307 = smul.addr %s306, 8
      %s308 = scalar_lea.vmem %s7, %s307
      %s309 = smul.u32 16, %s18
      %p310 = scmp.lt.s32.totalorder %s309, 63
      %s311 = scalar_select %p310, %s309, 63
      %s312 = smul.addr %s311, 2
      %s313 = smul.addr %s312, 4
      %s314 = scalar_lea.vmem %s0, %s313
      %s315 = smul.u32 16, %s18
      %s316 = smul.u32 16, %s18
      %p317 = scmp.lt.s32.totalorder %s316, 63
      %s318 = scalar_select %p317, %s316, 63
      %s319 = smul.addr %s318, 2
      %s320 = smul.addr %s319, 4
      %s321 = scalar_lea.vmem %s1, %s320
      %s322 = smul.u32 16, %s18
      %s323 = smul.u32 16, %s18
      %p324 = scmp.lt.s32.totalorder %s323, 63
      %s325 = scalar_select %p324, %s323, 63
      %s326 = smul.addr %s325, 2
      %s327 = smul.addr %s326, 4
      %s328 = scalar_lea.vmem %s2, %s327
      %s329 = smul.u32 16, %s18
      %s330 = smul.u32 16, %s18
      %p331 = scmp.lt.s32.totalorder %s330, 63
      %s332 = scalar_select %p331, %s330, 63
      %s333 = smul.addr %s332, 2
      %s334 = smul.addr %s333, 8
      %s335 = scalar_lea.vmem %s7, %s334
      %s336 = smul.u32 16, %s18
      %v338 = vld [vmem:[%s314] sm:$0xf]
      %v339 = vld [vmem:[%s314 + $0x4] sm:$0xf]
      %v340 = vld [vmem:[%s314 + $0x8] sm:$0xf]
      %v341 = vld [vmem:[%s314 + $0xc] sm:$0xf]
      %v342 = vld [vmem:[%s314 + $0x10] sm:$0xf]
      %v343 = vld [vmem:[%s314 + $0x14] sm:$0xf]
      %v344 = vld [vmem:[%s314 + $0x18] sm:$0xf]
      %v345 = vld [vmem:[%s314 + $0x1c] sm:$0xf]
      %v346 = vld [vmem:[%s314 + $0x20] sm:$0xf]
      %v347 = vld [vmem:[%s314 + $0x24] sm:$0xf]
      %v348 = vld [vmem:[%s314 + $0x28] sm:$0xf]
      %v349 = vld [vmem:[%s314 + $0x2c] sm:$0xf]
      %v350 = vld [vmem:[%s314 + $0x30] sm:$0xf]
      %v351 = vld [vmem:[%s314 + $0x34] sm:$0xf]
      %v352 = vld [vmem:[%s314 + $0x38] sm:$0xf]
      %v353 = vld [vmem:[%s314 + $0x3c] sm:$0xf]
      %v354 = vld [vmem:[%s314 + $0x40] sm:$0xf]
      %v355 = vld [vmem:[%s314 + $0x44] sm:$0xf]
      %v356 = vld [vmem:[%s314 + $0x48] sm:$0xf]
      %v357 = vld [vmem:[%s314 + $0x4c] sm:$0xf]
      %v358 = vld [vmem:[%s314 + $0x50] sm:$0xf]
      %v359 = vld [vmem:[%s314 + $0x54] sm:$0xf]
      %v360 = vld [vmem:[%s314 + $0x58] sm:$0xf]
      %v361 = vld [vmem:[%s314 + $0x5c] sm:$0xf]
      %v362 = vld [vmem:[%s314 + $0x60] sm:$0xf]
      %v363 = vld [vmem:[%s314 + $0x64] sm:$0xf]
      %v364 = vld [vmem:[%s314 + $0x68] sm:$0xf]
      %v365 = vld [vmem:[%s314 + $0x6c] sm:$0xf]
      %v366 = vld [vmem:[%s314 + $0x70] sm:$0xf]
      %v367 = vld [vmem:[%s314 + $0x74] sm:$0xf]
      %v368 = vld [vmem:[%s314 + $0x78] sm:$0xf]
      %v369 = vld [vmem:[%s314 + $0x7c] sm:$0xf]
      %v370 = vld [vmem:[%s321] sm:$0xf]
      %v371 = vld [vmem:[%s321 + $0x4] sm:$0xf]
      %v372 = vld [vmem:[%s321 + $0x8] sm:$0xf]
      %v373 = vld [vmem:[%s321 + $0xc] sm:$0xf]
      %v374 = vld [vmem:[%s321 + $0x10] sm:$0xf]
      %v375 = vld [vmem:[%s321 + $0x14] sm:$0xf]
      %v376 = vld [vmem:[%s321 + $0x18] sm:$0xf]
      %v377 = vld [vmem:[%s321 + $0x1c] sm:$0xf]
      %v378 = vld [vmem:[%s321 + $0x20] sm:$0xf]
      %v379 = vld [vmem:[%s321 + $0x24] sm:$0xf]
      %v380 = vld [vmem:[%s321 + $0x28] sm:$0xf]
      %v381 = vld [vmem:[%s321 + $0x2c] sm:$0xf]
      %v382 = vld [vmem:[%s321 + $0x30] sm:$0xf]
      %v383 = vld [vmem:[%s321 + $0x34] sm:$0xf]
      %v384 = vld [vmem:[%s321 + $0x38] sm:$0xf]
      %v385 = vld [vmem:[%s321 + $0x3c] sm:$0xf]
      %v386 = vld [vmem:[%s321 + $0x40] sm:$0xf]
      %v387 = vld [vmem:[%s321 + $0x44] sm:$0xf]
      %v388 = vld [vmem:[%s321 + $0x48] sm:$0xf]
      %v389 = vld [vmem:[%s321 + $0x4c] sm:$0xf]
      %v390 = vld [vmem:[%s321 + $0x50] sm:$0xf]
      %v391 = vld [vmem:[%s321 + $0x54] sm:$0xf]
      %v392 = vld [vmem:[%s321 + $0x58] sm:$0xf]
      %v393 = vld [vmem:[%s321 + $0x5c] sm:$0xf]
      %v394 = vld [vmem:[%s321 + $0x60] sm:$0xf]
      %v395 = vld [vmem:[%s321 + $0x64] sm:$0xf]
      %v396 = vld [vmem:[%s321 + $0x68] sm:$0xf]
      %v397 = vld [vmem:[%s321 + $0x6c] sm:$0xf]
      %v398 = vld [vmem:[%s321 + $0x70] sm:$0xf]
      %v399 = vld [vmem:[%s321 + $0x74] sm:$0xf]
      %v400 = vld [vmem:[%s321 + $0x78] sm:$0xf]
      %v401 = vld [vmem:[%s321 + $0x7c] sm:$0xf]
      %v402 = vld [vmem:[%s3] sm:$0xf]
      %v403 = vld [vmem:[%s3 + $0x4] sm:$0xf]
      %v436 = vunpack.c.l.b16 %v338
      %v437 = vunpack.c.l.b16 %v339
      %v438 = vunpack.c.l.b16 %v340
      %v439 = vunpack.c.l.b16 %v341
      %v440 = vunpack.c.l.b16 %v342
      %v441 = vunpack.c.l.b16 %v343
      %v442 = vunpack.c.l.b16 %v344
      %v443 = vunpack.c.l.b16 %v345
      %v444 = vunpack.c.l.b16 %v346
      %v445 = vunpack.c.l.b16 %v347
      %v446 = vunpack.c.l.b16 %v348
      %v447 = vunpack.c.l.b16 %v349
      %v448 = vunpack.c.l.b16 %v350
      %v449 = vunpack.c.l.b16 %v351
      %v450 = vunpack.c.l.b16 %v352
      %v451 = vunpack.c.l.b16 %v353
      %v452 = vunpack.c.l.b16 %v354
      %v453 = vunpack.c.l.b16 %v355
      %v454 = vunpack.c.l.b16 %v356
      %v455 = vunpack.c.l.b16 %v357
      %v456 = vunpack.c.l.b16 %v358
      %v457 = vunpack.c.l.b16 %v359
      %v458 = vunpack.c.l.b16 %v360
      %v459 = vunpack.c.l.b16 %v361
      %v460 = vunpack.c.l.b16 %v362
      %v461 = vunpack.c.l.b16 %v363
      %v462 = vunpack.c.l.b16 %v364
      %v463 = vunpack.c.l.b16 %v365
      %v464 = vunpack.c.l.b16 %v366
      %v465 = vunpack.c.l.b16 %v367
      %v466 = vunpack.c.l.b16 %v368
      %v467 = vunpack.c.l.b16 %v369
      %v468 = vpack.c.b16 %v437, %v436
      %v469 = vpack.c.b16 %v439, %v438
      %v470 = vpack.c.b16 %v441, %v440
      %v471 = vpack.c.b16 %v443, %v442
      %v472 = vpack.c.b16 %v445, %v444
      %v473 = vpack.c.b16 %v447, %v446
      %v474 = vpack.c.b16 %v449, %v448
      %v475 = vpack.c.b16 %v451, %v450
      %v476 = vpack.c.b16 %v453, %v452
      %v477 = vpack.c.b16 %v455, %v454
      %v478 = vpack.c.b16 %v457, %v456
      %v479 = vpack.c.b16 %v459, %v458
      %v480 = vpack.c.b16 %v461, %v460
      %v481 = vpack.c.b16 %v463, %v462
      %v482 = vpack.c.b16 %v465, %v464
      %v483 = vpack.c.b16 %v467, %v466
      %v486 = vunpack.c.l.b16 %v402
      %v487 = vunpack.c.l.b16 %v403
      %v488 = vpack.c.b16 %v487, %v486
      %vm490 = vcmask 130048
      %v492 = vsel %vm490, %v468, 0
      %v495 = vsel %vm490, %v469, 0
      %v498 = vsel %vm490, %v470, 0
      %v501 = vsel %vm490, %v471, 0
      %v504 = vsel %vm490, %v472, 0
      %v507 = vsel %vm490, %v473, 0
      %v510 = vsel %vm490, %v474, 0
      %v513 = vsel %vm490, %v475, 0
      %v516 = vsel %vm490, %v476, 0
      %v519 = vsel %vm490, %v477, 0
      %v522 = vsel %vm490, %v478, 0
      %v525 = vsel %vm490, %v479, 0
      %v528 = vsel %vm490, %v480, 0
      %v531 = vsel %vm490, %v481, 0
      %v534 = vsel %vm490, %v482, 0
      %v537 = vsel %vm490, %v483, 0
      %539 = vmatpush.bf16.msra.mxu0 0
      %540 = vmatpush.bf16.msra.mxu0 0
      %541 = vmatpush.bf16.msra.mxu0 0
      %542 = vmatpush.bf16.msra.mxu0 0
      %543 = vmatpush.bf16.msra.mxu0 0
      %544 = vmatpush.bf16.msra.mxu0 0
      %545 = vmatpush.bf16.msra.mxu0 0
      %546 = vmatpush.bf16.msra.mxu0 %v488
      %547 = vmatmul.bf16.gmra.mxu0 %v492
      %v548 = vpop.f32.mrf.mxu0
      %v549 = vadd.f32 0.0, %v548
      %v550 = vpop.f32.mrf.mxu0
      %v551 = vadd.f32 0.0, %v550
      %552 = vmatmul.bf16.gmra.mxu0 %v495
      %v553 = vpop.f32.mrf.mxu0
      %v554 = vadd.f32 0.0, %v553
      %v555 = vpop.f32.mrf.mxu0
      %v556 = vadd.f32 0.0, %v555
      %557 = vmatmul.bf16.gmra.mxu0 %v498
      %v558 = vpop.f32.mrf.mxu0
      %v559 = vadd.f32 0.0, %v558
      %v560 = vpop.f32.mrf.mxu0
      %v561 = vadd.f32 0.0, %v560
      %562 = vmatmul.bf16.gmra.mxu0 %v501
      %v563 = vpop.f32.mrf.mxu0
      %v564 = vadd.f32 0.0, %v563
      %v565 = vpop.f32.mrf.mxu0
      %v566 = vadd.f32 0.0, %v565
      %567 = vmatmul.bf16.gmra.mxu0 %v504
      %v568 = vpop.f32.mrf.mxu0
      %v569 = vadd.f32 0.0, %v568
      %v570 = vpop.f32.mrf.mxu0
      %v571 = vadd.f32 0.0, %v570
      %572 = vmatmul.bf16.gmra.mxu0 %v507
      %v573 = vpop.f32.mrf.mxu0
      %v574 = vadd.f32 0.0, %v573
      %v575 = vpop.f32.mrf.mxu0
      %v576 = vadd.f32 0.0, %v575
      %577 = vmatmul.bf16.gmra.mxu0 %v510
      %v578 = vpop.f32.mrf.mxu0
      %v579 = vadd.f32 0.0, %v578
      %v580 = vpop.f32.mrf.mxu0
      %v581 = vadd.f32 0.0, %v580
      %582 = vmatmul.bf16.gmra.mxu0 %v513
      %v583 = vpop.f32.mrf.mxu0
      %v584 = vadd.f32 0.0, %v583
      %v585 = vpop.f32.mrf.mxu0
      %v586 = vadd.f32 0.0, %v585
      %587 = vmatmul.bf16.gmra.mxu0 %v516
      %v588 = vpop.f32.mrf.mxu0
      %v589 = vadd.f32 0.0, %v588
      %v590 = vpop.f32.mrf.mxu0
      %v591 = vadd.f32 0.0, %v590
      %592 = vmatmul.bf16.gmra.mxu0 %v519
      %v593 = vpop.f32.mrf.mxu0
      %v594 = vadd.f32 0.0, %v593
      %v595 = vpop.f32.mrf.mxu0
      %v596 = vadd.f32 0.0, %v595
      %597 = vmatmul.bf16.gmra.mxu0 %v522
      %v598 = vpop.f32.mrf.mxu0
      %v599 = vadd.f32 0.0, %v598
      %v600 = vpop.f32.mrf.mxu0
      %v601 = vadd.f32 0.0, %v600
      %602 = vmatmul.bf16.gmra.mxu0 %v525
      %v603 = vpop.f32.mrf.mxu0
      %v604 = vadd.f32 0.0, %v603
      %v605 = vpop.f32.mrf.mxu0
      %v606 = vadd.f32 0.0, %v605
      %607 = vmatmul.bf16.gmra.mxu0 %v528
      %v608 = vpop.f32.mrf.mxu0
      %v609 = vadd.f32 0.0, %v608
      %v610 = vpop.f32.mrf.mxu0
      %v611 = vadd.f32 0.0, %v610
      %612 = vmatmul.bf16.gmra.mxu0 %v531
      %v613 = vpop.f32.mrf.mxu0
      %v614 = vadd.f32 0.0, %v613
      %v615 = vpop.f32.mrf.mxu0
      %v616 = vadd.f32 0.0, %v615
      %617 = vmatmul.bf16.gmra.mxu0 %v534
      %v618 = vpop.f32.mrf.mxu0
      %v619 = vadd.f32 0.0, %v618
      %v620 = vpop.f32.mrf.mxu0
      %v621 = vadd.f32 0.0, %v620
      %622 = vmatmul.bf16.gmra.mxu0 %v537
      %v623 = vpop.f32.mrf.mxu0
      %v624 = vadd.f32 0.0, %v623
      %v625 = vpop.f32.mrf.mxu0
      %v626 = vadd.f32 0.0, %v625
      %627 = vdwg.mxu0
      %v628 = vld [vmem:[%s4] sm:$0xff]
      %v629 = vld [vmem:[%s4 + $0x8] sm:$0xff]
      %v630 = vmul.f32 %v549, %v628
      %v631 = vmul.f32 %v551, %v629
      %v632 = vmul.f32 %v554, %v628
      %v633 = vmul.f32 %v556, %v629
      %v634 = vmul.f32 %v559, %v628
      %v635 = vmul.f32 %v561, %v629
      %v636 = vmul.f32 %v564, %v628
      %v637 = vmul.f32 %v566, %v629
      %v638 = vmul.f32 %v569, %v628
      %v639 = vmul.f32 %v571, %v629
      %v640 = vmul.f32 %v574, %v628
      %v641 = vmul.f32 %v576, %v629
      %v642 = vmul.f32 %v579, %v628
      %v643 = vmul.f32 %v581, %v629
      %v644 = vmul.f32 %v584, %v628
      %v645 = vmul.f32 %v586, %v629
      %v646 = vmul.f32 %v589, %v628
      %v647 = vmul.f32 %v591, %v629
      %v648 = vmul.f32 %v594, %v628
      %v649 = vmul.f32 %v596, %v629
      %v650 = vmul.f32 %v599, %v628
      %v651 = vmul.f32 %v601, %v629
      %v652 = vmul.f32 %v604, %v628
      %v653 = vmul.f32 %v606, %v629
      %v654 = vmul.f32 %v609, %v628
      %v655 = vmul.f32 %v611, %v629
      %v656 = vmul.f32 %v614, %v628
      %v657 = vmul.f32 %v616, %v629
      %v658 = vmul.f32 %v619, %v628
      %v659 = vmul.f32 %v621, %v629
      %v660 = vmul.f32 %v624, %v628
      %v661 = vmul.f32 %v626, %v629
      %v662 = vpack.c.bf16 %v631, %v630
      %v663 = vpack.c.bf16 %v633, %v632
      %v664 = vpack.c.bf16 %v635, %v634
      %v665 = vpack.c.bf16 %v637, %v636
      %v666 = vpack.c.bf16 %v639, %v638
      %v667 = vpack.c.bf16 %v641, %v640
      %v668 = vpack.c.bf16 %v643, %v642
      %v669 = vpack.c.bf16 %v645, %v644
      %v670 = vpack.c.bf16 %v647, %v646
      %v671 = vpack.c.bf16 %v649, %v648
      %v672 = vpack.c.bf16 %v651, %v650
      %v673 = vpack.c.bf16 %v653, %v652
      %v674 = vpack.c.bf16 %v655, %v654
      %v675 = vpack.c.bf16 %v657, %v656
      %v676 = vpack.c.bf16 %v659, %v658
      %v677 = vpack.c.bf16 %v661, %v660
      %v678 = vld [vmem:[%s5] sm:$0xf]
      %v679 = vld [vmem:[%s5 + $0x4] sm:$0xf]
      %v680 = vld [vmem:[%s5 + $0x8] sm:$0xf]
      %v681 = vld [vmem:[%s5 + $0xc] sm:$0xf]
      %v682 = vld [vmem:[%s5 + $0x10] sm:$0xf]
      %v683 = vld [vmem:[%s5 + $0x14] sm:$0xf]
      %v684 = vld [vmem:[%s5 + $0x18] sm:$0xf]
      %v685 = vld [vmem:[%s5 + $0x1c] sm:$0xf]
      %v686 = vld [vmem:[%s5 + $0x20] sm:$0xf]
      %v687 = vld [vmem:[%s5 + $0x24] sm:$0xf]
      %v688 = vld [vmem:[%s5 + $0x28] sm:$0xf]
      %v689 = vld [vmem:[%s5 + $0x2c] sm:$0xf]
      %v690 = vld [vmem:[%s5 + $0x30] sm:$0xf]
      %v691 = vld [vmem:[%s5 + $0x34] sm:$0xf]
      %v692 = vld [vmem:[%s5 + $0x38] sm:$0xf]
      %v693 = vld [vmem:[%s5 + $0x3c] sm:$0xf]
      %v710 = vunpack.c.l.b16 %v678
      %v711 = vunpack.c.l.b16 %v679
      %v712 = vunpack.c.l.b16 %v680
      %v713 = vunpack.c.l.b16 %v681
      %v714 = vunpack.c.l.b16 %v682
      %v715 = vunpack.c.l.b16 %v683
      %v716 = vunpack.c.l.b16 %v684
      %v717 = vunpack.c.l.b16 %v685
      %v718 = vunpack.c.l.b16 %v686
      %v719 = vunpack.c.l.b16 %v687
      %v720 = vunpack.c.l.b16 %v688
      %v721 = vunpack.c.l.b16 %v689
      %v722 = vunpack.c.l.b16 %v690
      %v723 = vunpack.c.l.b16 %v691
      %v724 = vunpack.c.l.b16 %v692
      %v725 = vunpack.c.l.b16 %v693
      %v726 = vpack.c.b16 %v711, %v710
      %v727 = vpack.c.b16 %v713, %v712
      %v728 = vpack.c.b16 %v715, %v714
      %v729 = vpack.c.b16 %v717, %v716
      %v730 = vpack.c.b16 %v719, %v718
      %v731 = vpack.c.b16 %v721, %v720
      %v732 = vpack.c.b16 %v723, %v722
      %v733 = vpack.c.b16 %v725, %v724
      %742 = vmatpush.bf16.msra.mxu0 %v733
      %743 = vmatpush.bf16.msra.mxu0 %v732
      %744 = vmatpush.bf16.msra.mxu0 %v731
      %745 = vmatpush.bf16.msra.mxu0 %v730
      %746 = vmatpush.bf16.msra.mxu0 %v729
      %747 = vmatpush.bf16.msra.mxu0 %v728
      %748 = vmatpush.bf16.msra.mxu0 %v727
      %749 = vmatpush.bf16.msra.mxu0 %v726
      %750 = vmatmul.bf16.gmra.mxu0 %v662
      %v751 = vpop.f32.mrf.mxu0
      %v752 = vadd.f32 0.0, %v751
      %v753 = vpop.f32.mrf.mxu0
      %v754 = vadd.f32 0.0, %v753
      %755 = vmatmul.bf16.gmra.mxu0 %v663
      %v756 = vpop.f32.mrf.mxu0
      %v757 = vadd.f32 0.0, %v756
      %v758 = vpop.f32.mrf.mxu0
      %v759 = vadd.f32 0.0, %v758
      %760 = vmatmul.bf16.gmra.mxu0 %v664
      %v761 = vpop.f32.mrf.mxu0
      %v762 = vadd.f32 0.0, %v761
      %v763 = vpop.f32.mrf.mxu0
      %v764 = vadd.f32 0.0, %v763
      %765 = vmatmul.bf16.gmra.mxu0 %v665
      %v766 = vpop.f32.mrf.mxu0
      %v767 = vadd.f32 0.0, %v766
      %v768 = vpop.f32.mrf.mxu0
      %v769 = vadd.f32 0.0, %v768
      %770 = vmatmul.bf16.gmra.mxu0 %v666
      %v771 = vpop.f32.mrf.mxu0
      %v772 = vadd.f32 0.0, %v771
      %v773 = vpop.f32.mrf.mxu0
      %v774 = vadd.f32 0.0, %v773
      %775 = vmatmul.bf16.gmra.mxu0 %v667
      %v776 = vpop.f32.mrf.mxu0
      %v777 = vadd.f32 0.0, %v776
      %v778 = vpop.f32.mrf.mxu0
      %v779 = vadd.f32 0.0, %v778
      %780 = vmatmul.bf16.gmra.mxu0 %v668
      %v781 = vpop.f32.mrf.mxu0
      %v782 = vadd.f32 0.0, %v781
      %v783 = vpop.f32.mrf.mxu0
      %v784 = vadd.f32 0.0, %v783
      %785 = vmatmul.bf16.gmra.mxu0 %v669
      %v786 = vpop.f32.mrf.mxu0
      %v787 = vadd.f32 0.0, %v786
      %v788 = vpop.f32.mrf.mxu0
      %v789 = vadd.f32 0.0, %v788
      %790 = vmatmul.bf16.gmra.mxu0 %v670
      %v791 = vpop.f32.mrf.mxu0
      %v792 = vadd.f32 0.0, %v791
      %v793 = vpop.f32.mrf.mxu0
      %v794 = vadd.f32 0.0, %v793
      %795 = vmatmul.bf16.gmra.mxu0 %v671
      %v796 = vpop.f32.mrf.mxu0
      %v797 = vadd.f32 0.0, %v796
      %v798 = vpop.f32.mrf.mxu0
      %v799 = vadd.f32 0.0, %v798
      %800 = vmatmul.bf16.gmra.mxu0 %v672
      %v801 = vpop.f32.mrf.mxu0
      %v802 = vadd.f32 0.0, %v801
      %v803 = vpop.f32.mrf.mxu0
      %v804 = vadd.f32 0.0, %v803
      %805 = vmatmul.bf16.gmra.mxu0 %v673
      %v806 = vpop.f32.mrf.mxu0
      %v807 = vadd.f32 0.0, %v806
      %v808 = vpop.f32.mrf.mxu0
      %v809 = vadd.f32 0.0, %v808
      %810 = vmatmul.bf16.gmra.mxu0 %v674
      %v811 = vpop.f32.mrf.mxu0
      %v812 = vadd.f32 0.0, %v811
      %v813 = vpop.f32.mrf.mxu0
      %v814 = vadd.f32 0.0, %v813
      %815 = vmatmul.bf16.gmra.mxu0 %v675
      %v816 = vpop.f32.mrf.mxu0
      %v817 = vadd.f32 0.0, %v816
      %v818 = vpop.f32.mrf.mxu0
      %v819 = vadd.f32 0.0, %v818
      %820 = vmatmul.bf16.gmra.mxu0 %v676
      %v821 = vpop.f32.mrf.mxu0
      %v822 = vadd.f32 0.0, %v821
      %v823 = vpop.f32.mrf.mxu0
      %v824 = vadd.f32 0.0, %v823
      %825 = vmatmul.bf16.gmra.mxu0 %v677
      %v826 = vpop.f32.mrf.mxu0
      %v827 = vadd.f32 0.0, %v826
      %v828 = vpop.f32.mrf.mxu0
      %v829 = vadd.f32 0.0, %v828
      %830 = vdwg.mxu0
      %v833 = vunpack.c.l.b16 %v370
      %v834 = vunpack.c.l.b16 %v371
      %v835 = vpack.c.b16 %v834, %v833
      %837 = vmatpush.bf16.msra.mxu0 0
      %838 = vmatpush.bf16.msra.mxu0 0
      %839 = vmatpush.bf16.msra.mxu0 0
      %840 = vmatpush.bf16.msra.mxu0 0
      %841 = vmatpush.bf16.msra.mxu0 0
      %842 = vmatpush.bf16.msra.mxu0 0
      %843 = vmatpush.bf16.msra.mxu0 0
      %844 = vmatpush.bf16.msra.mxu0 %v835
      %845 = vmatmul.bf16.gmra.mxu0 %v492
      %v846 = vpop.f32.mrf.mxu0
      %v847 = vadd.f32 %v752, %v846
      %v848 = vpop.f32.mrf.mxu0
      %v849 = vadd.f32 %v754, %v848
      %850 = vdwg.mxu0
      %v853 = vunpack.c.l.b16 %v372
      %v854 = vunpack.c.l.b16 %v373
      %v855 = vpack.c.b16 %v854, %v853
      %857 = vmatpush.bf16.msra.mxu0 0
      %858 = vmatpush.bf16.msra.mxu0 0
      %859 = vmatpush.bf16.msra.mxu0 0
      %860 = vmatpush.bf16.msra.mxu0 0
      %861 = vmatpush.bf16.msra.mxu0 0
      %862 = vmatpush.bf16.msra.mxu0 0
      %863 = vmatpush.bf16.msra.mxu0 0
      %864 = vmatpush.bf16.msra.mxu0 %v855
      %865 = vmatmul.bf16.gmra.mxu0 %v495
      %v866 = vpop.f32.mrf.mxu0
      %v867 = vadd.f32 %v757, %v866
      %v868 = vpop.f32.mrf.mxu0
      %v869 = vadd.f32 %v759, %v868
      %870 = vdwg.mxu0
      %v873 = vunpack.c.l.b16 %v374
      %v874 = vunpack.c.l.b16 %v375
      %v875 = vpack.c.b16 %v874, %v873
      %877 = vmatpush.bf16.msra.mxu0 0
      %878 = vmatpush.bf16.msra.mxu0 0
      %879 = vmatpush.bf16.msra.mxu0 0
      %880 = vmatpush.bf16.msra.mxu0 0
      %881 = vmatpush.bf16.msra.mxu0 0
      %882 = vmatpush.bf16.msra.mxu0 0
      %883 = vmatpush.bf16.msra.mxu0 0
      %884 = vmatpush.bf16.msra.mxu0 %v875
      %885 = vmatmul.bf16.gmra.mxu0 %v498
      %v886 = vpop.f32.mrf.mxu0
      %v887 = vadd.f32 %v762, %v886
      %v888 = vpop.f32.mrf.mxu0
      %v889 = vadd.f32 %v764, %v888
      %890 = vdwg.mxu0
      %v893 = vunpack.c.l.b16 %v376
      %v894 = vunpack.c.l.b16 %v377
      %v895 = vpack.c.b16 %v894, %v893
      %897 = vmatpush.bf16.msra.mxu0 0
      %898 = vmatpush.bf16.msra.mxu0 0
      %899 = vmatpush.bf16.msra.mxu0 0
      %900 = vmatpush.bf16.msra.mxu0 0
      %901 = vmatpush.bf16.msra.mxu0 0
      %902 = vmatpush.bf16.msra.mxu0 0
      %903 = vmatpush.bf16.msra.mxu0 0
      %904 = vmatpush.bf16.msra.mxu0 %v895
      %905 = vmatmul.bf16.gmra.mxu0 %v501
      %v906 = vpop.f32.mrf.mxu0
      %v907 = vadd.f32 %v767, %v906
      %v908 = vpop.f32.mrf.mxu0
      %v909 = vadd.f32 %v769, %v908
      %910 = vdwg.mxu0
      %v913 = vunpack.c.l.b16 %v378
      %v914 = vunpack.c.l.b16 %v379
      %v915 = vpack.c.b16 %v914, %v913
      %917 = vmatpush.bf16.msra.mxu0 0
      %918 = vmatpush.bf16.msra.mxu0 0
      %919 = vmatpush.bf16.msra.mxu0 0
      %920 = vmatpush.bf16.msra.mxu0 0
      %921 = vmatpush.bf16.msra.mxu0 0
      %922 = vmatpush.bf16.msra.mxu0 0
      %923 = vmatpush.bf16.msra.mxu0 0
      %924 = vmatpush.bf16.msra.mxu0 %v915
      %925 = vmatmul.bf16.gmra.mxu0 %v504
      %v926 = vpop.f32.mrf.mxu0
      %v927 = vadd.f32 %v772, %v926
      %v928 = vpop.f32.mrf.mxu0
      %v929 = vadd.f32 %v774, %v928
      %930 = vdwg.mxu0
      %v933 = vunpack.c.l.b16 %v380
      %v934 = vunpack.c.l.b16 %v381
      %v935 = vpack.c.b16 %v934, %v933
      %937 = vmatpush.bf16.msra.mxu0 0
      %938 = vmatpush.bf16.msra.mxu0 0
      %939 = vmatpush.bf16.msra.mxu0 0
      %940 = vmatpush.bf16.msra.mxu0 0
      %941 = vmatpush.bf16.msra.mxu0 0
      %942 = vmatpush.bf16.msra.mxu0 0
      %943 = vmatpush.bf16.msra.mxu0 0
      %944 = vmatpush.bf16.msra.mxu0 %v935
      %945 = vmatmul.bf16.gmra.mxu0 %v507
      %v946 = vpop.f32.mrf.mxu0
      %v947 = vadd.f32 %v777, %v946
      %v948 = vpop.f32.mrf.mxu0
      %v949 = vadd.f32 %v779, %v948
      %950 = vdwg.mxu0
      %v953 = vunpack.c.l.b16 %v382
      %v954 = vunpack.c.l.b16 %v383
      %v955 = vpack.c.b16 %v954, %v953
      %957 = vmatpush.bf16.msra.mxu0 0
      %958 = vmatpush.bf16.msra.mxu0 0
      %959 = vmatpush.bf16.msra.mxu0 0
      %960 = vmatpush.bf16.msra.mxu0 0
      %961 = vmatpush.bf16.msra.mxu0 0
      %962 = vmatpush.bf16.msra.mxu0 0
      %963 = vmatpush.bf16.msra.mxu0 0
      %964 = vmatpush.bf16.msra.mxu0 %v955
      %965 = vmatmul.bf16.gmra.mxu0 %v510
      %v966 = vpop.f32.mrf.mxu0
      %v967 = vadd.f32 %v782, %v966
      %v968 = vpop.f32.mrf.mxu0
      %v969 = vadd.f32 %v784, %v968
      %970 = vdwg.mxu0
      %v973 = vunpack.c.l.b16 %v384
      %v974 = vunpack.c.l.b16 %v385
      %v975 = vpack.c.b16 %v974, %v973
      %977 = vmatpush.bf16.msra.mxu0 0
      %978 = vmatpush.bf16.msra.mxu0 0
      %979 = vmatpush.bf16.msra.mxu0 0
      %980 = vmatpush.bf16.msra.mxu0 0
      %981 = vmatpush.bf16.msra.mxu0 0
      %982 = vmatpush.bf16.msra.mxu0 0
      %983 = vmatpush.bf16.msra.mxu0 0
      %984 = vmatpush.bf16.msra.mxu0 %v975
      %985 = vmatmul.bf16.gmra.mxu0 %v513
      %v986 = vpop.f32.mrf.mxu0
      %v987 = vadd.f32 %v787, %v986
      %v988 = vpop.f32.mrf.mxu0
      %v989 = vadd.f32 %v789, %v988
      %990 = vdwg.mxu0
      %v993 = vunpack.c.l.b16 %v386
      %v994 = vunpack.c.l.b16 %v387
      %v995 = vpack.c.b16 %v994, %v993
      %997 = vmatpush.bf16.msra.mxu0 0
      %998 = vmatpush.bf16.msra.mxu0 0
      %999 = vmatpush.bf16.msra.mxu0 0
      %1000 = vmatpush.bf16.msra.mxu0 0
      %1001 = vmatpush.bf16.msra.mxu0 0
      %1002 = vmatpush.bf16.msra.mxu0 0
      %1003 = vmatpush.bf16.msra.mxu0 0
      %1004 = vmatpush.bf16.msra.mxu0 %v995
      %1005 = vmatmul.bf16.gmra.mxu0 %v516
      %v1006 = vpop.f32.mrf.mxu0
      %v1007 = vadd.f32 %v792, %v1006
      %v1008 = vpop.f32.mrf.mxu0
      %v1009 = vadd.f32 %v794, %v1008
      %1010 = vdwg.mxu0
      %v1013 = vunpack.c.l.b16 %v388
      %v1014 = vunpack.c.l.b16 %v389
      %v1015 = vpack.c.b16 %v1014, %v1013
      %1017 = vmatpush.bf16.msra.mxu0 0
      %1018 = vmatpush.bf16.msra.mxu0 0
      %1019 = vmatpush.bf16.msra.mxu0 0
      %1020 = vmatpush.bf16.msra.mxu0 0
      %1021 = vmatpush.bf16.msra.mxu0 0
      %1022 = vmatpush.bf16.msra.mxu0 0
      %1023 = vmatpush.bf16.msra.mxu0 0
      %1024 = vmatpush.bf16.msra.mxu0 %v1015
      %1025 = vmatmul.bf16.gmra.mxu0 %v519
      %v1026 = vpop.f32.mrf.mxu0
      %v1027 = vadd.f32 %v797, %v1026
      %v1028 = vpop.f32.mrf.mxu0
      %v1029 = vadd.f32 %v799, %v1028
      %1030 = vdwg.mxu0
      %v1033 = vunpack.c.l.b16 %v390
      %v1034 = vunpack.c.l.b16 %v391
      %v1035 = vpack.c.b16 %v1034, %v1033
      %1037 = vmatpush.bf16.msra.mxu0 0
      %1038 = vmatpush.bf16.msra.mxu0 0
      %1039 = vmatpush.bf16.msra.mxu0 0
      %1040 = vmatpush.bf16.msra.mxu0 0
      %1041 = vmatpush.bf16.msra.mxu0 0
      %1042 = vmatpush.bf16.msra.mxu0 0
      %1043 = vmatpush.bf16.msra.mxu0 0
      %1044 = vmatpush.bf16.msra.mxu0 %v1035
      %1045 = vmatmul.bf16.gmra.mxu0 %v522
      %v1046 = vpop.f32.mrf.mxu0
      %v1047 = vadd.f32 %v802, %v1046
      %v1048 = vpop.f32.mrf.mxu0
      %v1049 = vadd.f32 %v804, %v1048
      %1050 = vdwg.mxu0
      %v1053 = vunpack.c.l.b16 %v392
      %v1054 = vunpack.c.l.b16 %v393
      %v1055 = vpack.c.b16 %v1054, %v1053
      %1057 = vmatpush.bf16.msra.mxu0 0
      %1058 = vmatpush.bf16.msra.mxu0 0
      %1059 = vmatpush.bf16.msra.mxu0 0
      %1060 = vmatpush.bf16.msra.mxu0 0
      %1061 = vmatpush.bf16.msra.mxu0 0
      %1062 = vmatpush.bf16.msra.mxu0 0
      %1063 = vmatpush.bf16.msra.mxu0 0
      %1064 = vmatpush.bf16.msra.mxu0 %v1055
      %1065 = vmatmul.bf16.gmra.mxu0 %v525
      %v1066 = vpop.f32.mrf.mxu0
      %v1067 = vadd.f32 %v807, %v1066
      %v1068 = vpop.f32.mrf.mxu0
      %v1069 = vadd.f32 %v809, %v1068
      %1070 = vdwg.mxu0
      %v1073 = vunpack.c.l.b16 %v394
      %v1074 = vunpack.c.l.b16 %v395
      %v1075 = vpack.c.b16 %v1074, %v1073
      %1077 = vmatpush.bf16.msra.mxu0 0
      %1078 = vmatpush.bf16.msra.mxu0 0
      %1079 = vmatpush.bf16.msra.mxu0 0
      %1080 = vmatpush.bf16.msra.mxu0 0
      %1081 = vmatpush.bf16.msra.mxu0 0
      %1082 = vmatpush.bf16.msra.mxu0 0
      %1083 = vmatpush.bf16.msra.mxu0 0
      %1084 = vmatpush.bf16.msra.mxu0 %v1075
      %1085 = vmatmul.bf16.gmra.mxu0 %v528
      %v1086 = vpop.f32.mrf.mxu0
      %v1087 = vadd.f32 %v812, %v1086
      %v1088 = vpop.f32.mrf.mxu0
      %v1089 = vadd.f32 %v814, %v1088
      %1090 = vdwg.mxu0
      %v1093 = vunpack.c.l.b16 %v396
      %v1094 = vunpack.c.l.b16 %v397
      %v1095 = vpack.c.b16 %v1094, %v1093
      %1097 = vmatpush.bf16.msra.mxu0 0
      %1098 = vmatpush.bf16.msra.mxu0 0
      %1099 = vmatpush.bf16.msra.mxu0 0
      %1100 = vmatpush.bf16.msra.mxu0 0
      %1101 = vmatpush.bf16.msra.mxu0 0
      %1102 = vmatpush.bf16.msra.mxu0 0
      %1103 = vmatpush.bf16.msra.mxu0 0
      %1104 = vmatpush.bf16.msra.mxu0 %v1095
      %1105 = vmatmul.bf16.gmra.mxu0 %v531
      %v1106 = vpop.f32.mrf.mxu0
      %v1107 = vadd.f32 %v817, %v1106
      %v1108 = vpop.f32.mrf.mxu0
      %v1109 = vadd.f32 %v819, %v1108
      %1110 = vdwg.mxu0
      %v1113 = vunpack.c.l.b16 %v398
      %v1114 = vunpack.c.l.b16 %v399
      %v1115 = vpack.c.b16 %v1114, %v1113
      %1117 = vmatpush.bf16.msra.mxu0 0
      %1118 = vmatpush.bf16.msra.mxu0 0
      %1119 = vmatpush.bf16.msra.mxu0 0
      %1120 = vmatpush.bf16.msra.mxu0 0
      %1121 = vmatpush.bf16.msra.mxu0 0
      %1122 = vmatpush.bf16.msra.mxu0 0
      %1123 = vmatpush.bf16.msra.mxu0 0
      %1124 = vmatpush.bf16.msra.mxu0 %v1115
      %1125 = vmatmul.bf16.gmra.mxu0 %v534
      %v1126 = vpop.f32.mrf.mxu0
      %v1127 = vadd.f32 %v822, %v1126
      %v1128 = vpop.f32.mrf.mxu0
      %v1129 = vadd.f32 %v824, %v1128
      %1130 = vdwg.mxu0
      %v1133 = vunpack.c.l.b16 %v400
      %v1134 = vunpack.c.l.b16 %v401
      %v1135 = vpack.c.b16 %v1134, %v1133
      %1137 = vmatpush.bf16.msra.mxu0 0
      %1138 = vmatpush.bf16.msra.mxu0 0
      %1139 = vmatpush.bf16.msra.mxu0 0
      %1140 = vmatpush.bf16.msra.mxu0 0
      %1141 = vmatpush.bf16.msra.mxu0 0
      %1142 = vmatpush.bf16.msra.mxu0 0
      %1143 = vmatpush.bf16.msra.mxu0 0
      %1144 = vmatpush.bf16.msra.mxu0 %v1135
      %1145 = vmatmul.bf16.gmra.mxu0 %v537
      %v1146 = vpop.f32.mrf.mxu0
      %v1147 = vadd.f32 %v827, %v1146
      %v1148 = vpop.f32.mrf.mxu0
      %v1149 = vadd.f32 %v829, %v1148
      %1150 = vdwg.mxu0
      %v1151 = vmul.f32 %v847, 0.25
      %v1152 = vmul.f32 %v849, 0.25
      %v1153 = vmul.f32 %v867, 0.25
      %v1154 = vmul.f32 %v869, 0.25
      %v1155 = vmul.f32 %v887, 0.25
      %v1156 = vmul.f32 %v889, 0.25
      %v1157 = vmul.f32 %v907, 0.25
      %v1158 = vmul.f32 %v909, 0.25
      %v1159 = vmul.f32 %v927, 0.25
      %v1160 = vmul.f32 %v929, 0.25
      %v1161 = vmul.f32 %v947, 0.25
      %v1162 = vmul.f32 %v949, 0.25
      %v1163 = vmul.f32 %v967, 0.25
      %v1164 = vmul.f32 %v969, 0.25
      %v1165 = vmul.f32 %v987, 0.25
      %v1166 = vmul.f32 %v989, 0.25
      %v1167 = vmul.f32 %v1007, 0.25
      %v1168 = vmul.f32 %v1009, 0.25
      %v1169 = vmul.f32 %v1027, 0.25
      %v1170 = vmul.f32 %v1029, 0.25
      %v1171 = vmul.f32 %v1047, 0.25
      %v1172 = vmul.f32 %v1049, 0.25
      %v1173 = vmul.f32 %v1067, 0.25
      %v1174 = vmul.f32 %v1069, 0.25
      %v1175 = vmul.f32 %v1087, 0.25
      %v1176 = vmul.f32 %v1089, 0.25
      %v1177 = vmul.f32 %v1107, 0.25
      %v1178 = vmul.f32 %v1109, 0.25
      %v1179 = vmul.f32 %v1127, 0.25
      %v1180 = vmul.f32 %v1129, 0.25
      %v1181 = vmul.f32 %v1147, 0.25
      %v1182 = vmul.f32 %v1149, 0.25
      %v1183 = vld [vmem:[%s6] sm:$0x1]
      %v1184 = vld [vmem:[%s6 + $0x1] sm:$0x1]
      %v1185 = vld [vmem:[%s6 + $0x2] sm:$0x1]
      %v1186 = vld [vmem:[%s6 + $0x3] sm:$0x1]
      %v1187 = vld [vmem:[%s6 + $0x4] sm:$0x1]
      %v1188 = vld [vmem:[%s6 + $0x5] sm:$0x1]
      %v1189 = vld [vmem:[%s6 + $0x6] sm:$0x1]
      %v1190 = vld [vmem:[%s6 + $0x7] sm:$0x1]
      %v1191 = vld [vmem:[%s6 + $0x8] sm:$0x1]
      %v1192 = vld [vmem:[%s6 + $0x9] sm:$0x1]
      %v1193 = vld [vmem:[%s6 + $0xa] sm:$0x1]
      %v1194 = vld [vmem:[%s6 + $0xb] sm:$0x1]
      %v1195 = vld [vmem:[%s6 + $0xc] sm:$0x1]
      %v1196 = vld [vmem:[%s6 + $0xd] sm:$0x1]
      %v1197 = vld [vmem:[%s6 + $0xe] sm:$0x1]
      %v1198 = vld [vmem:[%s6 + $0xf] sm:$0x1]
      %vm1199 = vcmp.gt.f32.partialorder %v1183, 0.5
      %vm1200 = vcmp.gt.f32.partialorder %v1184, 0.5
      %vm1201 = vcmp.gt.f32.partialorder %v1185, 0.5
      %vm1202 = vcmp.gt.f32.partialorder %v1186, 0.5
      %vm1203 = vcmp.gt.f32.partialorder %v1187, 0.5
      %vm1204 = vcmp.gt.f32.partialorder %v1188, 0.5
      %vm1205 = vcmp.gt.f32.partialorder %v1189, 0.5
      %vm1206 = vcmp.gt.f32.partialorder %v1190, 0.5
      %vm1207 = vcmp.gt.f32.partialorder %v1191, 0.5
      %vm1208 = vcmp.gt.f32.partialorder %v1192, 0.5
      %vm1209 = vcmp.gt.f32.partialorder %v1193, 0.5
      %vm1210 = vcmp.gt.f32.partialorder %v1194, 0.5
      %vm1211 = vcmp.gt.f32.partialorder %v1195, 0.5
      %vm1212 = vcmp.gt.f32.partialorder %v1196, 0.5
      %vm1213 = vcmp.gt.f32.partialorder %v1197, 0.5
      %vm1214 = vcmp.gt.f32.partialorder %v1198, 0.5
      %v1215 = vsel %vm1199, 1, 0
      %v1216 = vsel %vm1200, 1, 0
      %v1217 = vsel %vm1201, 1, 0
      %v1218 = vsel %vm1202, 1, 0
      %v1219 = vsel %vm1203, 1, 0
      %v1220 = vsel %vm1204, 1, 0
      %v1221 = vsel %vm1205, 1, 0
      %v1222 = vsel %vm1206, 1, 0
      %v1223 = vsel %vm1207, 1, 0
      %v1224 = vsel %vm1208, 1, 0
      %v1225 = vsel %vm1209, 1, 0
      %v1226 = vsel %vm1210, 1, 0
      %v1227 = vsel %vm1211, 1, 0
      %v1228 = vsel %vm1212, 1, 0
      %v1229 = vsel %vm1213, 1, 0
      %v1230 = vsel %vm1214, 1, 0
      %v1231 = vperm.slane %v1215, 0
      %v1232 = vperm.slane %v1216, 0
      %v1233 = vperm.slane %v1217, 0
      %v1234 = vperm.slane %v1218, 0
      %v1235 = vperm.slane %v1219, 0
      %v1236 = vperm.slane %v1220, 0
      %v1237 = vperm.slane %v1221, 0
      %v1238 = vperm.slane %v1222, 0
      %v1239 = vperm.slane %v1223, 0
      %v1240 = vperm.slane %v1224, 0
      %v1241 = vperm.slane %v1225, 0
      %v1242 = vperm.slane %v1226, 0
      %v1243 = vperm.slane %v1227, 0
      %v1244 = vperm.slane %v1228, 0
      %v1245 = vperm.slane %v1229, 0
      %v1246 = vperm.slane %v1230, 0
      %vm1247 = vcmp.eq.s32.totalorder %v1231, 1
      %vm1248 = vcmp.eq.s32.totalorder %v1232, 1
      %vm1249 = vcmp.eq.s32.totalorder %v1233, 1
      %vm1250 = vcmp.eq.s32.totalorder %v1234, 1
      %vm1251 = vcmp.eq.s32.totalorder %v1235, 1
      %vm1252 = vcmp.eq.s32.totalorder %v1236, 1
      %vm1253 = vcmp.eq.s32.totalorder %v1237, 1
      %vm1254 = vcmp.eq.s32.totalorder %v1238, 1
      %vm1255 = vcmp.eq.s32.totalorder %v1239, 1
      %vm1256 = vcmp.eq.s32.totalorder %v1240, 1
      %vm1257 = vcmp.eq.s32.totalorder %v1241, 1
      %vm1258 = vcmp.eq.s32.totalorder %v1242, 1
      %vm1259 = vcmp.eq.s32.totalorder %v1243, 1
      %vm1260 = vcmp.eq.s32.totalorder %v1244, 1
      %vm1261 = vcmp.eq.s32.totalorder %v1245, 1
      %vm1262 = vcmp.eq.s32.totalorder %v1246, 1
      %v1263 = vsel %vm1247, -3.4028235e+38, %v1151
      %v1264 = vsel %vm1247, -3.4028235e+38, %v1152
      %v1265 = vsel %vm1248, -3.4028235e+38, %v1153
      %v1266 = vsel %vm1248, -3.4028235e+38, %v1154
      %v1267 = vsel %vm1249, -3.4028235e+38, %v1155
      %v1268 = vsel %vm1249, -3.4028235e+38, %v1156
      %v1269 = vsel %vm1250, -3.4028235e+38, %v1157
      %v1270 = vsel %vm1250, -3.4028235e+38, %v1158
      %v1271 = vsel %vm1251, -3.4028235e+38, %v1159
      %v1272 = vsel %vm1251, -3.4028235e+38, %v1160
      %v1273 = vsel %vm1252, -3.4028235e+38, %v1161
      %v1274 = vsel %vm1252, -3.4028235e+38, %v1162
      %v1275 = vsel %vm1253, -3.4028235e+38, %v1163
      %v1276 = vsel %vm1253, -3.4028235e+38, %v1164
      %v1277 = vsel %vm1254, -3.4028235e+38, %v1165
      %v1278 = vsel %vm1254, -3.4028235e+38, %v1166
      %v1279 = vsel %vm1255, -3.4028235e+38, %v1167
      %v1280 = vsel %vm1255, -3.4028235e+38, %v1168
      %v1281 = vsel %vm1256, -3.4028235e+38, %v1169
      %v1282 = vsel %vm1256, -3.4028235e+38, %v1170
      %v1283 = vsel %vm1257, -3.4028235e+38, %v1171
      %v1284 = vsel %vm1257, -3.4028235e+38, %v1172
      %v1285 = vsel %vm1258, -3.4028235e+38, %v1173
      %v1286 = vsel %vm1258, -3.4028235e+38, %v1174
      %v1287 = vsel %vm1259, -3.4028235e+38, %v1175
      %v1288 = vsel %vm1259, -3.4028235e+38, %v1176
      %v1289 = vsel %vm1260, -3.4028235e+38, %v1177
      %v1290 = vsel %vm1260, -3.4028235e+38, %v1178
      %v1291 = vsel %vm1261, -3.4028235e+38, %v1179
      %v1292 = vsel %vm1261, -3.4028235e+38, %v1180
      %v1293 = vsel %vm1262, -3.4028235e+38, %v1181
      %v1294 = vsel %vm1262, -3.4028235e+38, %v1182
      %vm1295 = vcmask 523264
      %v1296 = vsel %vm1295, %v1263, -inf
      %1297 = vmax.xlane.f32.xlu0 %v1296
      %v1298 = vpop.xlane.xlu0 %1297
      %v1299 = vsel %vm1295, %v1264, -inf
      %1300 = vmax.xlane.f32.xlu0 %v1299
      %v1301 = vpop.xlane.xlu0 %1300
      %v1302 = vsel %vm1295, %v1265, -inf
      %1303 = vmax.xlane.f32.xlu0 %v1302
      %v1304 = vpop.xlane.xlu0 %1303
      %v1305 = vsel %vm1295, %v1266, -inf
      %1306 = vmax.xlane.f32.xlu0 %v1305
      %v1307 = vpop.xlane.xlu0 %1306
      %v1308 = vsel %vm1295, %v1267, -inf
      %1309 = vmax.xlane.f32.xlu0 %v1308
      %v1310 = vpop.xlane.xlu0 %1309
      %v1311 = vsel %vm1295, %v1268, -inf
      %1312 = vmax.xlane.f32.xlu0 %v1311
      %v1313 = vpop.xlane.xlu0 %1312
      %v1314 = vsel %vm1295, %v1269, -inf
      %1315 = vmax.xlane.f32.xlu0 %v1314
      %v1316 = vpop.xlane.xlu0 %1315
      %v1317 = vsel %vm1295, %v1270, -inf
      %1318 = vmax.xlane.f32.xlu0 %v1317
      %v1319 = vpop.xlane.xlu0 %1318
      %v1320 = vsel %vm1295, %v1271, -inf
      %1321 = vmax.xlane.f32.xlu0 %v1320
      %v1322 = vpop.xlane.xlu0 %1321
      %v1323 = vsel %vm1295, %v1272, -inf
      %1324 = vmax.xlane.f32.xlu0 %v1323
      %v1325 = vpop.xlane.xlu0 %1324
      %v1326 = vsel %vm1295, %v1273, -inf
      %1327 = vmax.xlane.f32.xlu0 %v1326
      %v1328 = vpop.xlane.xlu0 %1327
      %v1329 = vsel %vm1295, %v1274, -inf
      %1330 = vmax.xlane.f32.xlu0 %v1329
      %v1331 = vpop.xlane.xlu0 %1330
      %v1332 = vsel %vm1295, %v1275, -inf
      %1333 = vmax.xlane.f32.xlu0 %v1332
      %v1334 = vpop.xlane.xlu0 %1333
      %v1335 = vsel %vm1295, %v1276, -inf
      %1336 = vmax.xlane.f32.xlu0 %v1335
      %v1337 = vpop.xlane.xlu0 %1336
      %v1338 = vsel %vm1295, %v1277, -inf
      %1339 = vmax.xlane.f32.xlu0 %v1338
      %v1340 = vpop.xlane.xlu0 %1339
      %v1341 = vsel %vm1295, %v1278, -inf
      %1342 = vmax.xlane.f32.xlu0 %v1341
      %v1343 = vpop.xlane.xlu0 %1342
      %v1344 = vsel %vm1295, %v1279, -inf
      %1345 = vmax.xlane.f32.xlu0 %v1344
      %v1346 = vpop.xlane.xlu0 %1345
      %v1347 = vsel %vm1295, %v1280, -inf
      %1348 = vmax.xlane.f32.xlu0 %v1347
      %v1349 = vpop.xlane.xlu0 %1348
      %v1350 = vsel %vm1295, %v1281, -inf
      %1351 = vmax.xlane.f32.xlu0 %v1350
      %v1352 = vpop.xlane.xlu0 %1351
      %v1353 = vsel %vm1295, %v1282, -inf
      %1354 = vmax.xlane.f32.xlu0 %v1353
      %v1355 = vpop.xlane.xlu0 %1354
      %v1356 = vsel %vm1295, %v1283, -inf
      %1357 = vmax.xlane.f32.xlu0 %v1356
      %v1358 = vpop.xlane.xlu0 %1357
      %v1359 = vsel %vm1295, %v1284, -inf
      %1360 = vmax.xlane.f32.xlu0 %v1359
      %v1361 = vpop.xlane.xlu0 %1360
      %v1362 = vsel %vm1295, %v1285, -inf
      %1363 = vmax.xlane.f32.xlu0 %v1362
      %v1364 = vpop.xlane.xlu0 %1363
      %v1365 = vsel %vm1295, %v1286, -inf
      %1366 = vmax.xlane.f32.xlu0 %v1365
      %v1367 = vpop.xlane.xlu0 %1366
      %v1368 = vsel %vm1295, %v1287, -inf
      %1369 = vmax.xlane.f32.xlu0 %v1368
      %v1370 = vpop.xlane.xlu0 %1369
      %v1371 = vsel %vm1295, %v1288, -inf
      %1372 = vmax.xlane.f32.xlu0 %v1371
      %v1373 = vpop.xlane.xlu0 %1372
      %v1374 = vsel %vm1295, %v1289, -inf
      %1375 = vmax.xlane.f32.xlu0 %v1374
      %v1376 = vpop.xlane.xlu0 %1375
      %v1377 = vsel %vm1295, %v1290, -inf
      %1378 = vmax.xlane.f32.xlu0 %v1377
      %v1379 = vpop.xlane.xlu0 %1378
      %v1380 = vsel %vm1295, %v1291, -inf
      %1381 = vmax.xlane.f32.xlu0 %v1380
      %v1382 = vpop.xlane.xlu0 %1381
      %v1383 = vsel %vm1295, %v1292, -inf
      %1384 = vmax.xlane.f32.xlu0 %v1383
      %v1385 = vpop.xlane.xlu0 %1384
      %v1386 = vsel %vm1295, %v1293, -inf
      %1387 = vmax.xlane.f32.xlu0 %v1386
      %v1388 = vpop.xlane.xlu0 %1387
      %v1389 = vsel %vm1295, %v1294, -inf
      %1390 = vmax.xlane.f32.xlu0 %v1389
      %v1391 = vpop.xlane.xlu0 %1390
      %v1392 = vsub.f32 %v1263, %v1298
      %v1393 = vsub.f32 %v1264, %v1301
      %v1394 = vsub.f32 %v1265, %v1304
      %v1395 = vsub.f32 %v1266, %v1307
      %v1396 = vsub.f32 %v1267, %v1310
      %v1397 = vsub.f32 %v1268, %v1313
      %v1398 = vsub.f32 %v1269, %v1316
      %v1399 = vsub.f32 %v1270, %v1319
      %v1400 = vsub.f32 %v1271, %v1322
      %v1401 = vsub.f32 %v1272, %v1325
      %v1402 = vsub.f32 %v1273, %v1328
      %v1403 = vsub.f32 %v1274, %v1331
      %v1404 = vsub.f32 %v1275, %v1334
      %v1405 = vsub.f32 %v1276, %v1337
      %v1406 = vsub.f32 %v1277, %v1340
      %v1407 = vsub.f32 %v1278, %v1343
      %v1408 = vsub.f32 %v1279, %v1346
      %v1409 = vsub.f32 %v1280, %v1349
      %v1410 = vsub.f32 %v1281, %v1352
      %v1411 = vsub.f32 %v1282, %v1355
      %v1412 = vsub.f32 %v1283, %v1358
      %v1413 = vsub.f32 %v1284, %v1361
      %v1414 = vsub.f32 %v1285, %v1364
      %v1415 = vsub.f32 %v1286, %v1367
      %v1416 = vsub.f32 %v1287, %v1370
      %v1417 = vsub.f32 %v1288, %v1373
      %v1418 = vsub.f32 %v1289, %v1376
      %v1419 = vsub.f32 %v1290, %v1379
      %v1420 = vsub.f32 %v1291, %v1382
      %v1421 = vsub.f32 %v1292, %v1385
      %v1422 = vsub.f32 %v1293, %v1388
      %v1423 = vsub.f32 %v1294, %v1391
      %v1424 = vmul.f32 %v1392, 1.442695
      %v1425 = vpow.pop %v1424
      %v1426 = vmul.f32 %v1393, 1.442695
      %v1427 = vpow.pop %v1426
      %v1428 = vmul.f32 %v1394, 1.442695
      %v1429 = vpow.pop %v1428
      %v1430 = vmul.f32 %v1395, 1.442695
      %v1431 = vpow.pop %v1430
      %v1432 = vmul.f32 %v1396, 1.442695
      %v1433 = vpow.pop %v1432
      %v1434 = vmul.f32 %v1397, 1.442695
      %v1435 = vpow.pop %v1434
      %v1436 = vmul.f32 %v1398, 1.442695
      %v1437 = vpow.pop %v1436
      %v1438 = vmul.f32 %v1399, 1.442695
      %v1439 = vpow.pop %v1438
      %v1440 = vmul.f32 %v1400, 1.442695
      %v1441 = vpow.pop %v1440
      %v1442 = vmul.f32 %v1401, 1.442695
      %v1443 = vpow.pop %v1442
      %v1444 = vmul.f32 %v1402, 1.442695
      %v1445 = vpow.pop %v1444
      %v1446 = vmul.f32 %v1403, 1.442695
      %v1447 = vpow.pop %v1446
      %v1448 = vmul.f32 %v1404, 1.442695
      %v1449 = vpow.pop %v1448
      %v1450 = vmul.f32 %v1405, 1.442695
      %v1451 = vpow.pop %v1450
      %v1452 = vmul.f32 %v1406, 1.442695
      %v1453 = vpow.pop %v1452
      %v1454 = vmul.f32 %v1407, 1.442695
      %v1455 = vpow.pop %v1454
      %v1456 = vmul.f32 %v1408, 1.442695
      %v1457 = vpow.pop %v1456
      %v1458 = vmul.f32 %v1409, 1.442695
      %v1459 = vpow.pop %v1458
      %v1460 = vmul.f32 %v1410, 1.442695
      %v1461 = vpow.pop %v1460
      %v1462 = vmul.f32 %v1411, 1.442695
      %v1463 = vpow.pop %v1462
      %v1464 = vmul.f32 %v1412, 1.442695
      %v1465 = vpow.pop %v1464
      %v1466 = vmul.f32 %v1413, 1.442695
      %v1467 = vpow.pop %v1466
      %v1468 = vmul.f32 %v1414, 1.442695
      %v1469 = vpow.pop %v1468
      %v1470 = vmul.f32 %v1415, 1.442695
      %v1471 = vpow.pop %v1470
      %v1472 = vmul.f32 %v1416, 1.442695
      %v1473 = vpow.pop %v1472
      %v1474 = vmul.f32 %v1417, 1.442695
      %v1475 = vpow.pop %v1474
      %v1476 = vmul.f32 %v1418, 1.442695
      %v1477 = vpow.pop %v1476
      %v1478 = vmul.f32 %v1419, 1.442695
      %v1479 = vpow.pop %v1478
      %v1480 = vmul.f32 %v1420, 1.442695
      %v1481 = vpow.pop %v1480
      %v1482 = vmul.f32 %v1421, 1.442695
      %v1483 = vpow.pop %v1482
      %v1484 = vmul.f32 %v1422, 1.442695
      %v1485 = vpow.pop %v1484
      %v1486 = vmul.f32 %v1423, 1.442695
      %v1487 = vpow.pop %v1486
      %v1488 = vsel %vm1295, %v1425, 0.0
      %1489 = vadd.xlane.f32.xlu0 %v1488
      %v1490 = vpop.xlane.xlu0 %1489
      %v1491 = vsel %vm1295, %v1427, 0.0
      %1492 = vadd.xlane.f32.xlu0 %v1491
      %v1493 = vpop.xlane.xlu0 %1492
      %v1494 = vsel %vm1295, %v1429, 0.0
      %1495 = vadd.xlane.f32.xlu0 %v1494
      %v1496 = vpop.xlane.xlu0 %1495
      %v1497 = vsel %vm1295, %v1431, 0.0
      %1498 = vadd.xlane.f32.xlu0 %v1497
      %v1499 = vpop.xlane.xlu0 %1498
      %v1500 = vsel %vm1295, %v1433, 0.0
      %1501 = vadd.xlane.f32.xlu0 %v1500
      %v1502 = vpop.xlane.xlu0 %1501
      %v1503 = vsel %vm1295, %v1435, 0.0
      %1504 = vadd.xlane.f32.xlu0 %v1503
      %v1505 = vpop.xlane.xlu0 %1504
      %v1506 = vsel %vm1295, %v1437, 0.0
      %1507 = vadd.xlane.f32.xlu0 %v1506
      %v1508 = vpop.xlane.xlu0 %1507
      %v1509 = vsel %vm1295, %v1439, 0.0
      %1510 = vadd.xlane.f32.xlu0 %v1509
      %v1511 = vpop.xlane.xlu0 %1510
      %v1512 = vsel %vm1295, %v1441, 0.0
      %1513 = vadd.xlane.f32.xlu0 %v1512
      %v1514 = vpop.xlane.xlu0 %1513
      %v1515 = vsel %vm1295, %v1443, 0.0
      %1516 = vadd.xlane.f32.xlu0 %v1515
      %v1517 = vpop.xlane.xlu0 %1516
      %v1518 = vsel %vm1295, %v1445, 0.0
      %1519 = vadd.xlane.f32.xlu0 %v1518
      %v1520 = vpop.xlane.xlu0 %1519
      %v1521 = vsel %vm1295, %v1447, 0.0
      %1522 = vadd.xlane.f32.xlu0 %v1521
      %v1523 = vpop.xlane.xlu0 %1522
      %v1524 = vsel %vm1295, %v1449, 0.0
      %1525 = vadd.xlane.f32.xlu0 %v1524
      %v1526 = vpop.xlane.xlu0 %1525
      %v1527 = vsel %vm1295, %v1451, 0.0
      %1528 = vadd.xlane.f32.xlu0 %v1527
      %v1529 = vpop.xlane.xlu0 %1528
      %v1530 = vsel %vm1295, %v1453, 0.0
      %1531 = vadd.xlane.f32.xlu0 %v1530
      %v1532 = vpop.xlane.xlu0 %1531
      %v1533 = vsel %vm1295, %v1455, 0.0
      %1534 = vadd.xlane.f32.xlu0 %v1533
      %v1535 = vpop.xlane.xlu0 %1534
      %v1536 = vsel %vm1295, %v1457, 0.0
      %1537 = vadd.xlane.f32.xlu0 %v1536
      %v1538 = vpop.xlane.xlu0 %1537
      %v1539 = vsel %vm1295, %v1459, 0.0
      %1540 = vadd.xlane.f32.xlu0 %v1539
      %v1541 = vpop.xlane.xlu0 %1540
      %v1542 = vsel %vm1295, %v1461, 0.0
      %1543 = vadd.xlane.f32.xlu0 %v1542
      %v1544 = vpop.xlane.xlu0 %1543
      %v1545 = vsel %vm1295, %v1463, 0.0
      %1546 = vadd.xlane.f32.xlu0 %v1545
      %v1547 = vpop.xlane.xlu0 %1546
      %v1548 = vsel %vm1295, %v1465, 0.0
      %1549 = vadd.xlane.f32.xlu0 %v1548
      %v1550 = vpop.xlane.xlu0 %1549
      %v1551 = vsel %vm1295, %v1467, 0.0
      %1552 = vadd.xlane.f32.xlu0 %v1551
      %v1553 = vpop.xlane.xlu0 %1552
      %v1554 = vsel %vm1295, %v1469, 0.0
      %1555 = vadd.xlane.f32.xlu0 %v1554
      %v1556 = vpop.xlane.xlu0 %1555
      %v1557 = vsel %vm1295, %v1471, 0.0
      %1558 = vadd.xlane.f32.xlu0 %v1557
      %v1559 = vpop.xlane.xlu0 %1558
      %v1560 = vsel %vm1295, %v1473, 0.0
      %1561 = vadd.xlane.f32.xlu0 %v1560
      %v1562 = vpop.xlane.xlu0 %1561
      %v1563 = vsel %vm1295, %v1475, 0.0
      %1564 = vadd.xlane.f32.xlu0 %v1563
      %v1565 = vpop.xlane.xlu0 %1564
      %v1566 = vsel %vm1295, %v1477, 0.0
      %1567 = vadd.xlane.f32.xlu0 %v1566
      %v1568 = vpop.xlane.xlu0 %1567
      %v1569 = vsel %vm1295, %v1479, 0.0
      %1570 = vadd.xlane.f32.xlu0 %v1569
      %v1571 = vpop.xlane.xlu0 %1570
      %v1572 = vsel %vm1295, %v1481, 0.0
      %1573 = vadd.xlane.f32.xlu0 %v1572
      %v1574 = vpop.xlane.xlu0 %1573
      %v1575 = vsel %vm1295, %v1483, 0.0
      %1576 = vadd.xlane.f32.xlu0 %v1575
      %v1577 = vpop.xlane.xlu0 %1576
      %v1578 = vsel %vm1295, %v1485, 0.0
      %1579 = vadd.xlane.f32.xlu0 %v1578
      %v1580 = vpop.xlane.xlu0 %1579
      %v1581 = vsel %vm1295, %v1487, 0.0
      %1582 = vadd.xlane.f32.xlu0 %v1581
      %v1583 = vpop.xlane.xlu0 %1582
      %v1584 = vpack.c.bf16 %v1425, %v1425
      %v1585 = vpack.c.bf16 %v1427, %v1427
      %v1586 = vpack.c.bf16 %v1429, %v1429
      %v1587 = vpack.c.bf16 %v1431, %v1431
      %v1588 = vpack.c.bf16 %v1433, %v1433
      %v1589 = vpack.c.bf16 %v1435, %v1435
      %v1590 = vpack.c.bf16 %v1437, %v1437
      %v1591 = vpack.c.bf16 %v1439, %v1439
      %v1592 = vpack.c.bf16 %v1441, %v1441
      %v1593 = vpack.c.bf16 %v1443, %v1443
      %v1594 = vpack.c.bf16 %v1445, %v1445
      %v1595 = vpack.c.bf16 %v1447, %v1447
      %v1596 = vpack.c.bf16 %v1449, %v1449
      %v1597 = vpack.c.bf16 %v1451, %v1451
      %v1598 = vpack.c.bf16 %v1453, %v1453
      %v1599 = vpack.c.bf16 %v1455, %v1455
      %v1600 = vpack.c.bf16 %v1457, %v1457
      %v1601 = vpack.c.bf16 %v1459, %v1459
      %v1602 = vpack.c.bf16 %v1461, %v1461
      %v1603 = vpack.c.bf16 %v1463, %v1463
      %v1604 = vpack.c.bf16 %v1465, %v1465
      %v1605 = vpack.c.bf16 %v1467, %v1467
      %v1606 = vpack.c.bf16 %v1469, %v1469
      %v1607 = vpack.c.bf16 %v1471, %v1471
      %v1608 = vpack.c.bf16 %v1473, %v1473
      %v1609 = vpack.c.bf16 %v1475, %v1475
      %v1610 = vpack.c.bf16 %v1477, %v1477
      %v1611 = vpack.c.bf16 %v1479, %v1479
      %v1612 = vpack.c.bf16 %v1481, %v1481
      %v1613 = vpack.c.bf16 %v1483, %v1483
      %v1614 = vpack.c.bf16 %v1485, %v1485
      %v1615 = vpack.c.bf16 %v1487, %v1487
      %v1616 = vld [vmem:[%s328] sm:$0xf]
      %v1617 = vld [vmem:[%s328 + $0x4] sm:$0xf]
      %v1618 = vld [vmem:[%s328 + $0x8] sm:$0xf]
      %v1619 = vld [vmem:[%s328 + $0xc] sm:$0xf]
      %v1620 = vld [vmem:[%s328 + $0x10] sm:$0xf]
      %v1621 = vld [vmem:[%s328 + $0x14] sm:$0xf]
      %v1622 = vld [vmem:[%s328 + $0x18] sm:$0xf]
      %v1623 = vld [vmem:[%s328 + $0x1c] sm:$0xf]
      %v1624 = vld [vmem:[%s328 + $0x20] sm:$0xf]
      %v1625 = vld [vmem:[%s328 + $0x24] sm:$0xf]
      %v1626 = vld [vmem:[%s328 + $0x28] sm:$0xf]
      %v1627 = vld [vmem:[%s328 + $0x2c] sm:$0xf]
      %v1628 = vld [vmem:[%s328 + $0x30] sm:$0xf]
      %v1629 = vld [vmem:[%s328 + $0x34] sm:$0xf]
      %v1630 = vld [vmem:[%s328 + $0x38] sm:$0xf]
      %v1631 = vld [vmem:[%s328 + $0x3c] sm:$0xf]
      %v1632 = vld [vmem:[%s328 + $0x40] sm:$0xf]
      %v1633 = vld [vmem:[%s328 + $0x44] sm:$0xf]
      %v1634 = vld [vmem:[%s328 + $0x48] sm:$0xf]
      %v1635 = vld [vmem:[%s328 + $0x4c] sm:$0xf]
      %v1636 = vld [vmem:[%s328 + $0x50] sm:$0xf]
      %v1637 = vld [vmem:[%s328 + $0x54] sm:$0xf]
      %v1638 = vld [vmem:[%s328 + $0x58] sm:$0xf]
      %v1639 = vld [vmem:[%s328 + $0x5c] sm:$0xf]
      %v1640 = vld [vmem:[%s328 + $0x60] sm:$0xf]
      %v1641 = vld [vmem:[%s328 + $0x64] sm:$0xf]
      %v1642 = vld [vmem:[%s328 + $0x68] sm:$0xf]
      %v1643 = vld [vmem:[%s328 + $0x6c] sm:$0xf]
      %v1644 = vld [vmem:[%s328 + $0x70] sm:$0xf]
      %v1645 = vld [vmem:[%s328 + $0x74] sm:$0xf]
      %v1646 = vld [vmem:[%s328 + $0x78] sm:$0xf]
      %v1647 = vld [vmem:[%s328 + $0x7c] sm:$0xf]
      %v1650 = vunpack.c.l.b16 %v1584
      %v1651 = vunpack.c.l.b16 %v1585
      %v1652 = vpack.c.b16 %v1651, %v1650
      %v1655 = vunpack.c.l.b16 %v1616
      %v1656 = vunpack.c.l.b16 %v1617
      %v1657 = vpack.c.b16 %v1656, %v1655
      %v1659 = vsel %vm1295, %v1652, 0
      %v1662 = vsel %vm1295, %v1657, 0
      %1664 = vmatpush.bf16.xpose.msra.mxu0 0
      %1665 = vmatpush.bf16.xpose.msra.mxu0 0
      %1666 = vmatpush.bf16.xpose.msra.mxu0 0
      %1667 = vmatpush.bf16.xpose.msra.mxu0 0
      %1668 = vmatpush.bf16.xpose.msra.mxu0 0
      %1669 = vmatpush.bf16.xpose.msra.mxu0 0
      %1670 = vmatpush.bf16.xpose.msra.mxu0 0
      %1671 = vmatpush.bf16.xpose.msra.mxu0 %v1662
      %1672 = vmatmul.bf16.gmra.mxu0 %v1659
      %v1673 = vpop.f32.mrf.mxu0
      %v1674 = vadd.f32 0.0, %v1673
      %v1675 = vpop.f32.mrf.mxu0
      %v1676 = vadd.f32 0.0, %v1675
      %1677 = vdwg.mxu0
      %v1680 = vunpack.c.l.b16 %v1586
      %v1681 = vunpack.c.l.b16 %v1587
      %v1682 = vpack.c.b16 %v1681, %v1680
      %v1685 = vunpack.c.l.b16 %v1618
      %v1686 = vunpack.c.l.b16 %v1619
      %v1687 = vpack.c.b16 %v1686, %v1685
      %v1689 = vsel %vm1295, %v1682, 0
      %v1692 = vsel %vm1295, %v1687, 0
      %1694 = vmatpush.bf16.xpose.msra.mxu0 0
      %1695 = vmatpush.bf16.xpose.msra.mxu0 0
      %1696 = vmatpush.bf16.xpose.msra.mxu0 0
      %1697 = vmatpush.bf16.xpose.msra.mxu0 0
      %1698 = vmatpush.bf16.xpose.msra.mxu0 0
      %1699 = vmatpush.bf16.xpose.msra.mxu0 0
      %1700 = vmatpush.bf16.xpose.msra.mxu0 0
      %1701 = vmatpush.bf16.xpose.msra.mxu0 %v1692
      %1702 = vmatmul.bf16.gmra.mxu0 %v1689
      %v1703 = vpop.f32.mrf.mxu0
      %v1704 = vadd.f32 0.0, %v1703
      %v1705 = vpop.f32.mrf.mxu0
      %v1706 = vadd.f32 0.0, %v1705
      %1707 = vdwg.mxu0
      %v1710 = vunpack.c.l.b16 %v1588
      %v1711 = vunpack.c.l.b16 %v1589
      %v1712 = vpack.c.b16 %v1711, %v1710
      %v1715 = vunpack.c.l.b16 %v1620
      %v1716 = vunpack.c.l.b16 %v1621
      %v1717 = vpack.c.b16 %v1716, %v1715
      %v1719 = vsel %vm1295, %v1712, 0
      %v1722 = vsel %vm1295, %v1717, 0
      %1724 = vmatpush.bf16.xpose.msra.mxu0 0
      %1725 = vmatpush.bf16.xpose.msra.mxu0 0
      %1726 = vmatpush.bf16.xpose.msra.mxu0 0
      %1727 = vmatpush.bf16.xpose.msra.mxu0 0
      %1728 = vmatpush.bf16.xpose.msra.mxu0 0
      %1729 = vmatpush.bf16.xpose.msra.mxu0 0
      %1730 = vmatpush.bf16.xpose.msra.mxu0 0
      %1731 = vmatpush.bf16.xpose.msra.mxu0 %v1722
      %1732 = vmatmul.bf16.gmra.mxu0 %v1719
      %v1733 = vpop.f32.mrf.mxu0
      %v1734 = vadd.f32 0.0, %v1733
      %v1735 = vpop.f32.mrf.mxu0
      %v1736 = vadd.f32 0.0, %v1735
      %1737 = vdwg.mxu0
      %v1740 = vunpack.c.l.b16 %v1590
      %v1741 = vunpack.c.l.b16 %v1591
      %v1742 = vpack.c.b16 %v1741, %v1740
      %v1745 = vunpack.c.l.b16 %v1622
      %v1746 = vunpack.c.l.b16 %v1623
      %v1747 = vpack.c.b16 %v1746, %v1745
      %v1749 = vsel %vm1295, %v1742, 0
      %v1752 = vsel %vm1295, %v1747, 0
      %1754 = vmatpush.bf16.xpose.msra.mxu0 0
      %1755 = vmatpush.bf16.xpose.msra.mxu0 0
      %1756 = vmatpush.bf16.xpose.msra.mxu0 0
      %1757 = vmatpush.bf16.xpose.msra.mxu0 0
      %1758 = vmatpush.bf16.xpose.msra.mxu0 0
      %1759 = vmatpush.bf16.xpose.msra.mxu0 0
      %1760 = vmatpush.bf16.xpose.msra.mxu0 0
      %1761 = vmatpush.bf16.xpose.msra.mxu0 %v1752
      %1762 = vmatmul.bf16.gmra.mxu0 %v1749
      %v1763 = vpop.f32.mrf.mxu0
      %v1764 = vadd.f32 0.0, %v1763
      %v1765 = vpop.f32.mrf.mxu0
      %v1766 = vadd.f32 0.0, %v1765
      %1767 = vdwg.mxu0
      %v1770 = vunpack.c.l.b16 %v1592
      %v1771 = vunpack.c.l.b16 %v1593
      %v1772 = vpack.c.b16 %v1771, %v1770
      %v1775 = vunpack.c.l.b16 %v1624
      %v1776 = vunpack.c.l.b16 %v1625
      %v1777 = vpack.c.b16 %v1776, %v1775
      %v1779 = vsel %vm1295, %v1772, 0
      %v1782 = vsel %vm1295, %v1777, 0
      %1784 = vmatpush.bf16.xpose.msra.mxu0 0
      %1785 = vmatpush.bf16.xpose.msra.mxu0 0
      %1786 = vmatpush.bf16.xpose.msra.mxu0 0
      %1787 = vmatpush.bf16.xpose.msra.mxu0 0
      %1788 = vmatpush.bf16.xpose.msra.mxu0 0
      %1789 = vmatpush.bf16.xpose.msra.mxu0 0
      %1790 = vmatpush.bf16.xpose.msra.mxu0 0
      %1791 = vmatpush.bf16.xpose.msra.mxu0 %v1782
      %1792 = vmatmul.bf16.gmra.mxu0 %v1779
      %v1793 = vpop.f32.mrf.mxu0
      %v1794 = vadd.f32 0.0, %v1793
      %v1795 = vpop.f32.mrf.mxu0
      %v1796 = vadd.f32 0.0, %v1795
      %1797 = vdwg.mxu0
      %v1800 = vunpack.c.l.b16 %v1594
      %v1801 = vunpack.c.l.b16 %v1595
      %v1802 = vpack.c.b16 %v1801, %v1800
      %v1805 = vunpack.c.l.b16 %v1626
      %v1806 = vunpack.c.l.b16 %v1627
      %v1807 = vpack.c.b16 %v1806, %v1805
      %v1809 = vsel %vm1295, %v1802, 0
      %v1812 = vsel %vm1295, %v1807, 0
      %1814 = vmatpush.bf16.xpose.msra.mxu0 0
      %1815 = vmatpush.bf16.xpose.msra.mxu0 0
      %1816 = vmatpush.bf16.xpose.msra.mxu0 0
      %1817 = vmatpush.bf16.xpose.msra.mxu0 0
      %1818 = vmatpush.bf16.xpose.msra.mxu0 0
      %1819 = vmatpush.bf16.xpose.msra.mxu0 0
      %1820 = vmatpush.bf16.xpose.msra.mxu0 0
      %1821 = vmatpush.bf16.xpose.msra.mxu0 %v1812
      %1822 = vmatmul.bf16.gmra.mxu0 %v1809
      %v1823 = vpop.f32.mrf.mxu0
      %v1824 = vadd.f32 0.0, %v1823
      %v1825 = vpop.f32.mrf.mxu0
      %v1826 = vadd.f32 0.0, %v1825
      %1827 = vdwg.mxu0
      %v1830 = vunpack.c.l.b16 %v1596
      %v1831 = vunpack.c.l.b16 %v1597
      %v1832 = vpack.c.b16 %v1831, %v1830
      %v1835 = vunpack.c.l.b16 %v1628
      %v1836 = vunpack.c.l.b16 %v1629
      %v1837 = vpack.c.b16 %v1836, %v1835
      %v1839 = vsel %vm1295, %v1832, 0
      %v1842 = vsel %vm1295, %v1837, 0
      %1844 = vmatpush.bf16.xpose.msra.mxu0 0
      %1845 = vmatpush.bf16.xpose.msra.mxu0 0
      %1846 = vmatpush.bf16.xpose.msra.mxu0 0
      %1847 = vmatpush.bf16.xpose.msra.mxu0 0
      %1848 = vmatpush.bf16.xpose.msra.mxu0 0
      %1849 = vmatpush.bf16.xpose.msra.mxu0 0
      %1850 = vmatpush.bf16.xpose.msra.mxu0 0
      %1851 = vmatpush.bf16.xpose.msra.mxu0 %v1842
      %1852 = vmatmul.bf16.gmra.mxu0 %v1839
      %v1853 = vpop.f32.mrf.mxu0
      %v1854 = vadd.f32 0.0, %v1853
      %v1855 = vpop.f32.mrf.mxu0
      %v1856 = vadd.f32 0.0, %v1855
      %1857 = vdwg.mxu0
      %v1860 = vunpack.c.l.b16 %v1598
      %v1861 = vunpack.c.l.b16 %v1599
      %v1862 = vpack.c.b16 %v1861, %v1860
      %v1865 = vunpack.c.l.b16 %v1630
      %v1866 = vunpack.c.l.b16 %v1631
      %v1867 = vpack.c.b16 %v1866, %v1865
      %v1869 = vsel %vm1295, %v1862, 0
      %v1872 = vsel %vm1295, %v1867, 0
      %1874 = vmatpush.bf16.xpose.msra.mxu0 0
      %1875 = vmatpush.bf16.xpose.msra.mxu0 0
      %1876 = vmatpush.bf16.xpose.msra.mxu0 0
      %1877 = vmatpush.bf16.xpose.msra.mxu0 0
      %1878 = vmatpush.bf16.xpose.msra.mxu0 0
      %1879 = vmatpush.bf16.xpose.msra.mxu0 0
      %1880 = vmatpush.bf16.xpose.msra.mxu0 0
      %1881 = vmatpush.bf16.xpose.msra.mxu0 %v1872
      %1882 = vmatmul.bf16.gmra.mxu0 %v1869
      %v1883 = vpop.f32.mrf.mxu0
      %v1884 = vadd.f32 0.0, %v1883
      %v1885 = vpop.f32.mrf.mxu0
      %v1886 = vadd.f32 0.0, %v1885
      %1887 = vdwg.mxu0
      %v1890 = vunpack.c.l.b16 %v1600
      %v1891 = vunpack.c.l.b16 %v1601
      %v1892 = vpack.c.b16 %v1891, %v1890
      %v1895 = vunpack.c.l.b16 %v1632
      %v1896 = vunpack.c.l.b16 %v1633
      %v1897 = vpack.c.b16 %v1896, %v1895
      %v1899 = vsel %vm1295, %v1892, 0
      %v1902 = vsel %vm1295, %v1897, 0
      %1904 = vmatpush.bf16.xpose.msra.mxu0 0
      %1905 = vmatpush.bf16.xpose.msra.mxu0 0
      %1906 = vmatpush.bf16.xpose.msra.mxu0 0
      %1907 = vmatpush.bf16.xpose.msra.mxu0 0
      %1908 = vmatpush.bf16.xpose.msra.mxu0 0
      %1909 = vmatpush.bf16.xpose.msra.mxu0 0
      %1910 = vmatpush.bf16.xpose.msra.mxu0 0
      %1911 = vmatpush.bf16.xpose.msra.mxu0 %v1902
      %1912 = vmatmul.bf16.gmra.mxu0 %v1899
      %v1913 = vpop.f32.mrf.mxu0
      %v1914 = vadd.f32 0.0, %v1913
      %v1915 = vpop.f32.mrf.mxu0
      %v1916 = vadd.f32 0.0, %v1915
      %1917 = vdwg.mxu0
      %v1920 = vunpack.c.l.b16 %v1602
      %v1921 = vunpack.c.l.b16 %v1603
      %v1922 = vpack.c.b16 %v1921, %v1920
      %v1925 = vunpack.c.l.b16 %v1634
      %v1926 = vunpack.c.l.b16 %v1635
      %v1927 = vpack.c.b16 %v1926, %v1925
      %v1929 = vsel %vm1295, %v1922, 0
      %v1932 = vsel %vm1295, %v1927, 0
      %1934 = vmatpush.bf16.xpose.msra.mxu0 0
      %1935 = vmatpush.bf16.xpose.msra.mxu0 0
      %1936 = vmatpush.bf16.xpose.msra.mxu0 0
      %1937 = vmatpush.bf16.xpose.msra.mxu0 0
      %1938 = vmatpush.bf16.xpose.msra.mxu0 0
      %1939 = vmatpush.bf16.xpose.msra.mxu0 0
      %1940 = vmatpush.bf16.xpose.msra.mxu0 0
      %1941 = vmatpush.bf16.xpose.msra.mxu0 %v1932
      %1942 = vmatmul.bf16.gmra.mxu0 %v1929
      %v1943 = vpop.f32.mrf.mxu0
      %v1944 = vadd.f32 0.0, %v1943
      %v1945 = vpop.f32.mrf.mxu0
      %v1946 = vadd.f32 0.0, %v1945
      %1947 = vdwg.mxu0
      %v1950 = vunpack.c.l.b16 %v1604
      %v1951 = vunpack.c.l.b16 %v1605
      %v1952 = vpack.c.b16 %v1951, %v1950
      %v1955 = vunpack.c.l.b16 %v1636
      %v1956 = vunpack.c.l.b16 %v1637
      %v1957 = vpack.c.b16 %v1956, %v1955
      %v1959 = vsel %vm1295, %v1952, 0
      %v1962 = vsel %vm1295, %v1957, 0
      %1964 = vmatpush.bf16.xpose.msra.mxu0 0
      %1965 = vmatpush.bf16.xpose.msra.mxu0 0
      %1966 = vmatpush.bf16.xpose.msra.mxu0 0
      %1967 = vmatpush.bf16.xpose.msra.mxu0 0
      %1968 = vmatpush.bf16.xpose.msra.mxu0 0
      %1969 = vmatpush.bf16.xpose.msra.mxu0 0
      %1970 = vmatpush.bf16.xpose.msra.mxu0 0
      %1971 = vmatpush.bf16.xpose.msra.mxu0 %v1962
      %1972 = vmatmul.bf16.gmra.mxu0 %v1959
      %v1973 = vpop.f32.mrf.mxu0
      %v1974 = vadd.f32 0.0, %v1973
      %v1975 = vpop.f32.mrf.mxu0
      %v1976 = vadd.f32 0.0, %v1975
      %1977 = vdwg.mxu0
      %v1980 = vunpack.c.l.b16 %v1606
      %v1981 = vunpack.c.l.b16 %v1607
      %v1982 = vpack.c.b16 %v1981, %v1980
      %v1985 = vunpack.c.l.b16 %v1638
      %v1986 = vunpack.c.l.b16 %v1639
      %v1987 = vpack.c.b16 %v1986, %v1985
      %v1989 = vsel %vm1295, %v1982, 0
      %v1992 = vsel %vm1295, %v1987, 0
      %1994 = vmatpush.bf16.xpose.msra.mxu0 0
      %1995 = vmatpush.bf16.xpose.msra.mxu0 0
      %1996 = vmatpush.bf16.xpose.msra.mxu0 0
      %1997 = vmatpush.bf16.xpose.msra.mxu0 0
      %1998 = vmatpush.bf16.xpose.msra.mxu0 0
      %1999 = vmatpush.bf16.xpose.msra.mxu0 0
      %2000 = vmatpush.bf16.xpose.msra.mxu0 0
      %2001 = vmatpush.bf16.xpose.msra.mxu0 %v1992
      %2002 = vmatmul.bf16.gmra.mxu0 %v1989
      %v2003 = vpop.f32.mrf.mxu0
      %v2004 = vadd.f32 0.0, %v2003
      %v2005 = vpop.f32.mrf.mxu0
      %v2006 = vadd.f32 0.0, %v2005
      %2007 = vdwg.mxu0
      %v2010 = vunpack.c.l.b16 %v1608
      %v2011 = vunpack.c.l.b16 %v1609
      %v2012 = vpack.c.b16 %v2011, %v2010
      %v2015 = vunpack.c.l.b16 %v1640
      %v2016 = vunpack.c.l.b16 %v1641
      %v2017 = vpack.c.b16 %v2016, %v2015
      %v2019 = vsel %vm1295, %v2012, 0
      %v2022 = vsel %vm1295, %v2017, 0
      %2024 = vmatpush.bf16.xpose.msra.mxu0 0
      %2025 = vmatpush.bf16.xpose.msra.mxu0 0
      %2026 = vmatpush.bf16.xpose.msra.mxu0 0
      %2027 = vmatpush.bf16.xpose.msra.mxu0 0
      %2028 = vmatpush.bf16.xpose.msra.mxu0 0
      %2029 = vmatpush.bf16.xpose.msra.mxu0 0
      %2030 = vmatpush.bf16.xpose.msra.mxu0 0
      %2031 = vmatpush.bf16.xpose.msra.mxu0 %v2022
      %2032 = vmatmul.bf16.gmra.mxu0 %v2019
      %v2033 = vpop.f32.mrf.mxu0
      %v2034 = vadd.f32 0.0, %v2033
      %v2035 = vpop.f32.mrf.mxu0
      %v2036 = vadd.f32 0.0, %v2035
      %2037 = vdwg.mxu0
      %v2040 = vunpack.c.l.b16 %v1610
      %v2041 = vunpack.c.l.b16 %v1611
      %v2042 = vpack.c.b16 %v2041, %v2040
      %v2045 = vunpack.c.l.b16 %v1642
      %v2046 = vunpack.c.l.b16 %v1643
      %v2047 = vpack.c.b16 %v2046, %v2045
      %v2049 = vsel %vm1295, %v2042, 0
      %v2052 = vsel %vm1295, %v2047, 0
      %2054 = vmatpush.bf16.xpose.msra.mxu0 0
      %2055 = vmatpush.bf16.xpose.msra.mxu0 0
      %2056 = vmatpush.bf16.xpose.msra.mxu0 0
      %2057 = vmatpush.bf16.xpose.msra.mxu0 0
      %2058 = vmatpush.bf16.xpose.msra.mxu0 0
      %2059 = vmatpush.bf16.xpose.msra.mxu0 0
      %2060 = vmatpush.bf16.xpose.msra.mxu0 0
      %2061 = vmatpush.bf16.xpose.msra.mxu0 %v2052
      %2062 = vmatmul.bf16.gmra.mxu0 %v2049
      %v2063 = vpop.f32.mrf.mxu0
      %v2064 = vadd.f32 0.0, %v2063
      %v2065 = vpop.f32.mrf.mxu0
      %v2066 = vadd.f32 0.0, %v2065
      %2067 = vdwg.mxu0
      %v2070 = vunpack.c.l.b16 %v1612
      %v2071 = vunpack.c.l.b16 %v1613
      %v2072 = vpack.c.b16 %v2071, %v2070
      %v2075 = vunpack.c.l.b16 %v1644
      %v2076 = vunpack.c.l.b16 %v1645
      %v2077 = vpack.c.b16 %v2076, %v2075
      %v2079 = vsel %vm1295, %v2072, 0
      %v2082 = vsel %vm1295, %v2077, 0
      %2084 = vmatpush.bf16.xpose.msra.mxu0 0
      %2085 = vmatpush.bf16.xpose.msra.mxu0 0
      %2086 = vmatpush.bf16.xpose.msra.mxu0 0
      %2087 = vmatpush.bf16.xpose.msra.mxu0 0
      %2088 = vmatpush.bf16.xpose.msra.mxu0 0
      %2089 = vmatpush.bf16.xpose.msra.mxu0 0
      %2090 = vmatpush.bf16.xpose.msra.mxu0 0
      %2091 = vmatpush.bf16.xpose.msra.mxu0 %v2082
      %2092 = vmatmul.bf16.gmra.mxu0 %v2079
      %v2093 = vpop.f32.mrf.mxu0
      %v2094 = vadd.f32 0.0, %v2093
      %v2095 = vpop.f32.mrf.mxu0
      %v2096 = vadd.f32 0.0, %v2095
      %2097 = vdwg.mxu0
      %v2100 = vunpack.c.l.b16 %v1614
      %v2101 = vunpack.c.l.b16 %v1615
      %v2102 = vpack.c.b16 %v2101, %v2100
      %v2105 = vunpack.c.l.b16 %v1646
      %v2106 = vunpack.c.l.b16 %v1647
      %v2107 = vpack.c.b16 %v2106, %v2105
      %v2109 = vsel %vm1295, %v2102, 0
      %v2112 = vsel %vm1295, %v2107, 0
      %2114 = vmatpush.bf16.xpose.msra.mxu0 0
      %2115 = vmatpush.bf16.xpose.msra.mxu0 0
      %2116 = vmatpush.bf16.xpose.msra.mxu0 0
      %2117 = vmatpush.bf16.xpose.msra.mxu0 0
      %2118 = vmatpush.bf16.xpose.msra.mxu0 0
      %2119 = vmatpush.bf16.xpose.msra.mxu0 0
      %2120 = vmatpush.bf16.xpose.msra.mxu0 0
      %2121 = vmatpush.bf16.xpose.msra.mxu0 %v2112
      %2122 = vmatmul.bf16.gmra.mxu0 %v2109
      %v2123 = vpop.f32.mrf.mxu0
      %v2124 = vadd.f32 0.0, %v2123
      %v2125 = vpop.f32.mrf.mxu0
      %v2126 = vadd.f32 0.0, %v2125
      %2127 = vdwg.mxu0
      %v2128 = vrcp.pop %v1490
      %v2129 = vrcp.pop %v1493
      %v2130 = vrcp.pop %v1496
      %v2131 = vrcp.pop %v1499
      %v2132 = vrcp.pop %v1502
      %v2133 = vrcp.pop %v1505
      %v2134 = vrcp.pop %v1508
      %v2135 = vrcp.pop %v1511
      %v2136 = vrcp.pop %v1514
      %v2137 = vrcp.pop %v1517
      %v2138 = vrcp.pop %v1520
      %v2139 = vrcp.pop %v1523
      %v2140 = vrcp.pop %v1526
      %v2141 = vrcp.pop %v1529
      %v2142 = vrcp.pop %v1532
      %v2143 = vrcp.pop %v1535
      %v2144 = vrcp.pop %v1538
      %v2145 = vrcp.pop %v1541
      %v2146 = vrcp.pop %v1544
      %v2147 = vrcp.pop %v1547
      %v2148 = vrcp.pop %v1550
      %v2149 = vrcp.pop %v1553
      %v2150 = vrcp.pop %v1556
      %v2151 = vrcp.pop %v1559
      %v2152 = vrcp.pop %v1562
      %v2153 = vrcp.pop %v1565
      %v2154 = vrcp.pop %v1568
      %v2155 = vrcp.pop %v1571
      %v2156 = vrcp.pop %v1574
      %v2157 = vrcp.pop %v1577
      %v2158 = vrcp.pop %v1580
      %v2159 = vrcp.pop %v1583
      %v2160 = vmul.f32 %v1674, %v2128
      %v2161 = vmul.f32 %v1676, %v2129
      %v2162 = vmul.f32 %v1704, %v2130
      %v2163 = vmul.f32 %v1706, %v2131
      %v2164 = vmul.f32 %v1734, %v2132
      %v2165 = vmul.f32 %v1736, %v2133
      %v2166 = vmul.f32 %v1764, %v2134
      %v2167 = vmul.f32 %v1766, %v2135
      %v2168 = vmul.f32 %v1794, %v2136
      %v2169 = vmul.f32 %v1796, %v2137
      %v2170 = vmul.f32 %v1824, %v2138
      %v2171 = vmul.f32 %v1826, %v2139
      %v2172 = vmul.f32 %v1854, %v2140
      %v2173 = vmul.f32 %v1856, %v2141
      %v2174 = vmul.f32 %v1884, %v2142
      %v2175 = vmul.f32 %v1886, %v2143
      %v2176 = vmul.f32 %v1914, %v2144
      %v2177 = vmul.f32 %v1916, %v2145
      %v2178 = vmul.f32 %v1944, %v2146
      %v2179 = vmul.f32 %v1946, %v2147
      %v2180 = vmul.f32 %v1974, %v2148
      %v2181 = vmul.f32 %v1976, %v2149
      %v2182 = vmul.f32 %v2004, %v2150
      %v2183 = vmul.f32 %v2006, %v2151
      %v2184 = vmul.f32 %v2034, %v2152
      %v2185 = vmul.f32 %v2036, %v2153
      %v2186 = vmul.f32 %v2064, %v2154
      %v2187 = vmul.f32 %v2066, %v2155
      %v2188 = vmul.f32 %v2094, %v2156
      %v2189 = vmul.f32 %v2096, %v2157
      %v2190 = vmul.f32 %v2124, %v2158
      %v2191 = vmul.f32 %v2126, %v2159
      %2192 = vst.msk [vmem:[%s335] sm:$0xff] %vm490, %v2160
      %2193 = vst.msk [vmem:[%s335 + $0x8] sm:$0xff] %vm490, %v2161
      %2194 = vst.msk [vmem:[%s335 + $0x10] sm:$0xff] %vm490, %v2162
      %2195 = vst.msk [vmem:[%s335 + $0x18] sm:$0xff] %vm490, %v2163
      %2196 = vst.msk [vmem:[%s335 + $0x20] sm:$0xff] %vm490, %v2164
      %2197 = vst.msk [vmem:[%s335 + $0x28] sm:$0xff] %vm490, %v2165
      %2198 = vst.msk [vmem:[%s335 + $0x30] sm:$0xff] %vm490, %v2166
      %2199 = vst.msk [vmem:[%s335 + $0x38] sm:$0xff] %vm490, %v2167
      %2200 = vst.msk [vmem:[%s335 + $0x40] sm:$0xff] %vm490, %v2168
      %2201 = vst.msk [vmem:[%s335 + $0x48] sm:$0xff] %vm490, %v2169
      %2202 = vst.msk [vmem:[%s335 + $0x50] sm:$0xff] %vm490, %v2170
      %2203 = vst.msk [vmem:[%s335 + $0x58] sm:$0xff] %vm490, %v2171
      %2204 = vst.msk [vmem:[%s335 + $0x60] sm:$0xff] %vm490, %v2172
      %2205 = vst.msk [vmem:[%s335 + $0x68] sm:$0xff] %vm490, %v2173
      %2206 = vst.msk [vmem:[%s335 + $0x70] sm:$0xff] %vm490, %v2174
      %2207 = vst.msk [vmem:[%s335 + $0x78] sm:$0xff] %vm490, %v2175
      %2208 = vst.msk [vmem:[%s335 + $0x80] sm:$0xff] %vm490, %v2176
      %2209 = vst.msk [vmem:[%s335 + $0x88] sm:$0xff] %vm490, %v2177
      %2210 = vst.msk [vmem:[%s335 + $0x90] sm:$0xff] %vm490, %v2178
      %2211 = vst.msk [vmem:[%s335 + $0x98] sm:$0xff] %vm490, %v2179
      %2212 = vst.msk [vmem:[%s335 + $0xa0] sm:$0xff] %vm490, %v2180
      %2213 = vst.msk [vmem:[%s335 + $0xa8] sm:$0xff] %vm490, %v2181
      %2214 = vst.msk [vmem:[%s335 + $0xb0] sm:$0xff] %vm490, %v2182
      %2215 = vst.msk [vmem:[%s335 + $0xb8] sm:$0xff] %vm490, %v2183
      %2216 = vst.msk [vmem:[%s335 + $0xc0] sm:$0xff] %vm490, %v2184
      %2217 = vst.msk [vmem:[%s335 + $0xc8] sm:$0xff] %vm490, %v2185
      %2218 = vst.msk [vmem:[%s335 + $0xd0] sm:$0xff] %vm490, %v2186
      %2219 = vst.msk [vmem:[%s335 + $0xd8] sm:$0xff] %vm490, %v2187
      %2220 = vst.msk [vmem:[%s335 + $0xe0] sm:$0xff] %vm490, %v2188
      %2221 = vst.msk [vmem:[%s335 + $0xe8] sm:$0xff] %vm490, %v2189
      %2222 = vst.msk [vmem:[%s335 + $0xf0] sm:$0xff] %vm490, %v2190
      %2223 = vst.msk [vmem:[%s335 + $0xf8] sm:$0xff] %vm490, %v2191
      %s2224 = smul.u32 16, %s18
      %p2225 = scmp.lt.s32.totalorder %s2224, 63
      %s2226 = scalar_select %p2225, %s2224, 63
      %s2227 = smul.addr %s2226, 2
      %s2228 = smul.addr %s2227, 8
      %s2229 = scalar_lea.vmem %s7, %s2228
      // Predicated region
      $region49: #{halo_attention_forward.1} parent=47 // pred_check
        %p2230 = pneg %p198
      $region50: #{halo_attention_forward.1} parent=47 // pred_check_branch
        %2232 = sbr.rel (%p2230) target = $region52
      $region51: #{halo_attention_forward.1} parent=47 // pred_region
        %s2233 = smul.u32 16, %s18
      $region52: #{halo_attention_forward.1} parent=47 // pred_fallthru
        _
    $region48: #{halo_attention_forward.1} parent=5 // pred_fallthru
      _
    %p2234 = scmp.le.s32.totalorder 2, %s13
    // Predicated region
    $region53: #{halo_attention_forward.1} parent=5 // pred_check
      %p2235 = pneg %p2234
    $region54: #{halo_attention_forward.1} parent=5 // pred_check_branch
      %2237 = sbr.rel (%p2235) target = $region56
    $region55: #{halo_attention_forward.1} parent=5 // pred_region
      %s2238 = ssub.s32 %s13, 2
      // Predicated region
      $region57: #{halo_attention_forward.1} parent=55 // pred_check
        %p2239 = pneg %p204
      $region58: #{halo_attention_forward.1} parent=55 // pred_check_branch
        %2241 = sbr.rel (%p2239) target = $region60
      $region59: #{halo_attention_forward.1} parent=55 // pred_region
        %s2242 = smul.u32 16, %s19
        %p2243 = scmp.lt.s32.totalorder %s2242, 63
        %s2244 = scalar_select %p2243, %s2242, 63
        %s2245 = smul.addr %s2244, 2
        %s2246 = smul.addr %s2245, 8
        %s2247 = scalar_lea.vmem %s7, %s2246
      $region60: #{halo_attention_forward.1} parent=55 // pred_fallthru
        _
    $region56: #{halo_attention_forward.1} parent=5 // pred_fallthru
      _
  $region6: #{halo_attention_forward.1} parent=0 // loop_footer
    %s17 = sadd.s32 1, %s13
  $region7: #{halo_attention_forward.1} parent=0 // loop_footer_branch
    %12 = sbr.rel target = $region3
  $region8: #{halo_attention_forward.1} parent=0 // loop_exit
    _

</llo_original>
